<compile_context>
chip_gen: v7x
topology: tpu7x:2x2x1
jax: 0.10.0
libtpu: 0.0.40
codegen_flags: <defaults>
</compile_context>

<pallas_src>
import math
import functools

import jax
import jax.numpy as jnp
from jax.experimental import pallas as pl
from jax.experimental.pallas import tpu as pltpu


# Set True to feed bf16 into the MXU (recommended on v6e/v7x at realistic
# sizes; accumulation stays f32).  Kept False here to preserve f32 numerics at
# these toy shapes.
MATMUL_IN_BF16 = False


def _mm(a, b):
    if MATMUL_IN_BF16:
        a = a.astype(jnp.bfloat16)
        b = b.astype(jnp.bfloat16)
    return jnp.dot(a, b, preferred_element_type=jnp.float32)


def _mm_t(a, b):
    # a @ b.T without an explicit transpose (contract last dim of both)
    if MATMUL_IN_BF16:
        a = a.astype(jnp.bfloat16)
        b = b.astype(jnp.bfloat16)
    return jax.lax.dot_general(a, b, (((1,), (1,)), ((), ())),
                               preferred_element_type=jnp.float32)


def _ln(x, g, b, eps=1e-5):
    mu = jnp.mean(x, axis=-1, keepdims=True)
    var = jnp.mean(jnp.square(x - mu), axis=-1, keepdims=True)
    return (x - mu) * jax.lax.rsqrt(var + eps) * g + b


# ----------------------------------------------------------------------------
# Fused transformer-block kernel: one grid step = one batch element's (L, D)
# ----------------------------------------------------------------------------
def _lang_block_kernel(x_ref, ln1g_ref, ln1b_ref, wqkv_ref, bqkv_ref,
                       wo_ref, bo_ref, ln2g_ref, ln2b_ref,
                       w1_ref, b1_ref, w2_ref, b2_ref, o_ref,
                       *, n_heads, scale):
    x = x_ref[0].astype(jnp.float32)                     # (L, D)
    L, D = x.shape
    Dh = D // n_heads

    # ---- pre-norm LN1 + fused QKV projection (one MXU pass, N = 3D) ----
    h = _ln(x, ln1g_ref[...], ln1b_ref[...])
    qkv = _mm(h, wqkv_ref[...]) + bqkv_ref[...]          # (L, 3D)
    q = qkv[:, 0:D]
    k = qkv[:, D:2 * D]
    v = qkv[:, 2 * D:3 * D]

    # ---- multi-head attention, static unrolled loop over heads ----
    # (head split via static lane slices -> no transposes / relayouts)
    head_outs = []
    for hd in range(n_heads):
        sl = slice(hd * Dh, (hd + 1) * Dh)
        qh, kh, vh = q[:, sl], k[:, sl], v[:, sl]        # (L, Dh) each
        s = _mm_t(qh, kh) * scale                        # (L, L)
        m = jnp.max(s, axis=-1, keepdims=True)
        p = jnp.exp(s - m)
        p = p * pl.reciprocal(jnp.sum(p, axis=-1, keepdims=True), approx=True)
        head_outs.append(_mm(p, vh))                     # (L, Dh)
    attn = jnp.concatenate(head_outs, axis=-1)           # (L, D)

    # ---- output projection + residual ----
    x = x + _mm(attn, wo_ref[...]) + bo_ref[...]

    # ---- pre-norm MLP (GELU) + residual ----
    h2 = _ln(x, ln2g_ref[...], ln2b_ref[...])
    mid = jax.nn.gelu(_mm(h2, w1_ref[...]) + b1_ref[...], approximate=True)
    x = x + _mm(mid, w2_ref[...]) + b2_ref[...]

    o_ref[0] = x.astype(o_ref.dtype)


def lang_block_pallas(x, blk, *, n_heads):
    B, L, D = x.shape
    F = blk["w1"].shape[1]
    scale = 1.0 / math.sqrt(D // n_heads)
    kern = functools.partial(_lang_block_kernel, n_heads=n_heads, scale=scale)

    row3 = lambda b: (b, 0, 0)     # per-batch (1, L, D) tile
    rep2 = lambda b: (0, 0)        # whole weight, resident across grid

    return pl.pallas_call(
        kern,
        out_shape=jax.ShapeDtypeStruct((B, L, D), jnp.float32),
        grid=(B,),
        in_specs=[
            pl.BlockSpec((1, L, D), row3),
            pl.BlockSpec((1, D), rep2),        # ln1 gamma
            pl.BlockSpec((1, D), rep2),        # ln1 beta
            pl.BlockSpec((D, 3 * D), rep2),    # packed Wqkv
            pl.BlockSpec((1, 3 * D), rep2),    # packed bqkv
            pl.BlockSpec((D, D), rep2),        # Wo
            pl.BlockSpec((1, D), rep2),        # bo
            pl.BlockSpec((1, D), rep2),        # ln2 gamma
            pl.BlockSpec((1, D), rep2),        # ln2 beta
            pl.BlockSpec((D, F), rep2),        # W1
            pl.BlockSpec((1, F), rep2),        # b1
            pl.BlockSpec((F, D), rep2),        # W2
            pl.BlockSpec((1, D), rep2),        # b2
        ],
        out_specs=pl.BlockSpec((1, L, D), row3),
        compiler_params=pltpu.CompilerParams(dimension_semantics=("parallel",)),
    )(x,
      blk["ln1_g"].reshape(1, D), blk["ln1_b"].reshape(1, D),
      blk["wqkv"], blk["bqkv"].reshape(1, 3 * D),
      blk["wo"], blk["bo"].reshape(1, D),
      blk["ln2_g"].reshape(1, D), blk["ln2_b"].reshape(1, D),
      blk["w1"], blk["b1"].reshape(1, F),
      blk["w2"], blk["b2"].reshape(1, D))


# ----------------------------------------------------------------------------
# Fused final projection + LayerNorm kernel
# ----------------------------------------------------------------------------
def _proj_norm_kernel(x_ref, w_ref, b_ref, g_ref, be_ref, o_ref):
    y = _mm(x_ref[0].astype(jnp.float32), w_ref[...]) + b_ref[...]   # (L, N)
    o_ref[0] = _ln(y, g_ref[...], be_ref[...]).astype(o_ref.dtype)


def proj_norm_pallas(x, w, b, gamma, beta):
    B, L, D = x.shape
    N = w.shape[1]
    row3 = lambda bb: (bb, 0, 0)
    rep2 = lambda bb: (0, 0)
    return pl.pallas_call(
        _proj_norm_kernel,
        out_shape=jax.ShapeDtypeStruct((B, L, N), jnp.float32),
        grid=(B,),
        in_specs=[pl.BlockSpec((1, L, D), row3),
                  pl.BlockSpec((D, N), rep2),
                  pl.BlockSpec((1, N), rep2),
                  pl.BlockSpec((1, N), rep2),
                  pl.BlockSpec((1, N), rep2)],
        out_specs=pl.BlockSpec((1, L, N), row3),
        compiler_params=pltpu.CompilerParams(dimension_semantics=("parallel",)),
    )(x, w, b.reshape(1, N), gamma.reshape(1, N), beta.reshape(1, N))


# ----------------------------------------------------------------------------
# Parameter construction (deterministic, synthetic)
# ----------------------------------------------------------------------------
def positionalencoding1d(d_model, length):
    position = jnp.arange(length, dtype=jnp.float32)[:, None]
    div_term = jnp.exp(jnp.arange(0, d_model, 2, dtype=jnp.float32)
                       * -(math.log(10000.0) / d_model))
    pe = jnp.zeros((length, d_model), jnp.float32)
    pe = pe.at[:, 0::2].set(jnp.sin(position * div_term))
    pe = pe.at[:, 1::2].set(jnp.cos(position * div_term))
    return pe


def init_params(key, vocab, d_lang, d_model, n_layers, d_ff):
    keys = iter(jax.random.split(key, 4 * n_layers + 4))

    def rnd(shape):
        return jax.random.normal(next(keys), shape, jnp.float32) * 0.02

    emb = rnd((vocab, d_lang)).at[0].set(0.0)            # padding_idx=0 zeroed

    blocks = []
    for _ in range(n_layers):
        blocks.append(dict(
            ln1_g=jnp.ones((d_lang,), jnp.float32),
            ln1_b=jnp.zeros((d_lang,), jnp.float32),
            wqkv=rnd((d_lang, 3 * d_lang)),              # packed Q|K|V
            bqkv=jnp.zeros((3 * d_lang,), jnp.float32),
            wo=rnd((d_lang, d_lang)),
            bo=jnp.zeros((d_lang,), jnp.float32),
            ln2_g=jnp.ones((d_lang,), jnp.float32),
            ln2_b=jnp.zeros((d_lang,), jnp.float32),
            w1=rnd((d_lang, d_ff)),
            b1=jnp.zeros((d_ff,), jnp.float32),
            w2=rnd((d_ff, d_lang)),
            b2=jnp.zeros((d_lang,), jnp.float32),
        ))

    return dict(
        emb=emb,
        pos=positionalencoding1d(d_lang, 20),            # (20, d_lang)
        blocks=blocks,
        proj_w=rnd((d_lang, d_model)),
        proj_b=jnp.zeros((d_model,), jnp.float32),
        lnf_g=jnp.ones((d_model,), jnp.float32),
        lnf_b=jnp.zeros((d_model,), jnp.float32),
    )


# ----------------------------------------------------------------------------
# Forward pass: embedding gather + pos-add in plain-JAX glue, everything else
# in two fused Pallas kernels per forward layer-group.
# ----------------------------------------------------------------------------
def tr_glove_forward(params, ids, *, n_heads):
    B, L = ids.shape
    # embedding lookup (data-dependent gather) + positional encoding add
    x = jnp.take(params["emb"], ids, axis=0)             # (B, L, d_lang)
    x = x + params["pos"][None, :L, :]

    for blk in params["blocks"]:
        x = lang_block_pallas(x, blk, n_heads=n_heads)   # one call per block

    return proj_norm_pallas(x, params["proj_w"], params["proj_b"],
                            params["lnf_g"], params["lnf_b"])


# ----------------------------------------------------------------------------
if __name__ == "__main__":
    # small, self-consistent shapes (pos_emb_l is built for length 20)
    B, L = 2, 20
    vocab, d_lang = 50, 64
    d_model, n_layers, d_ff, n_heads = 32, 2, 128, 4

    k_params, k_ids = jax.random.split(jax.random.PRNGKey(0))
    params = init_params(k_params, vocab, d_lang, d_model, n_layers, d_ff)
    ids = jax.random.randint(k_ids, (B, L), 0, vocab, dtype=jnp.int32)

    fwd = jax.jit(functools.partial(tr_glove_forward, n_heads=n_heads))
    out = jax.block_until_ready(fwd(params, ids))
    assert out.shape == (B, L, d_model) and out.dtype == jnp.float32
    print("KERNEL_OK")
</pallas_src>

<mosaic_0001>
module attributes {stable_mosaic.version = 11 : i64} {
  func.func @_lang_block_kernel(%arg0: i32, %arg1: memref<1x20x64xf32, #tpu.memory_space<vmem>>, %arg2: memref<1x64xf32, #tpu.memory_space<vmem>>, %arg3: memref<1x64xf32, #tpu.memory_space<vmem>>, %arg4: memref<64x192xf32, #tpu.memory_space<vmem>>, %arg5: memref<1x192xf32, #tpu.memory_space<vmem>>, %arg6: memref<64x64xf32, #tpu.memory_space<vmem>>, %arg7: memref<1x64xf32, #tpu.memory_space<vmem>>, %arg8: memref<1x64xf32, #tpu.memory_space<vmem>>, %arg9: memref<1x64xf32, #tpu.memory_space<vmem>>, %arg10: memref<64x128xf32, #tpu.memory_space<vmem>>, %arg11: memref<1x128xf32, #tpu.memory_space<vmem>>, %arg12: memref<128x64xf32, #tpu.memory_space<vmem>>, %arg13: memref<1x64xf32, #tpu.memory_space<vmem>>, %arg14: memref<1x20x64xf32, #tpu.memory_space<vmem>>) attributes {dimension_semantics = [#tpu.dimension_semantics<parallel>], iteration_bounds = array<i64: 2>, scalar_prefetch = 0 : i64, scratch_operands = 0 : i64, tpu.core_type = #tpu.core_type<tc>, window_params = [{transform_indices = @transform_0, window_bounds = array<i64: 1, 20, 64>}, {pipeline_mode = #tpu.pipeline_mode<synchronous>, transform_indices = @transform_1, window_bounds = array<i64: 1, 64>}, {pipeline_mode = #tpu.pipeline_mode<synchronous>, transform_indices = @transform_2, window_bounds = array<i64: 1, 64>}, {pipeline_mode = #tpu.pipeline_mode<synchronous>, transform_indices = @transform_3, window_bounds = array<i64: 64, 192>}, {pipeline_mode = #tpu.pipeline_mode<synchronous>, transform_indices = @transform_4, window_bounds = array<i64: 1, 192>}, {pipeline_mode = #tpu.pipeline_mode<synchronous>, transform_indices = @transform_5, window_bounds = array<i64: 64, 64>}, {pipeline_mode = #tpu.pipeline_mode<synchronous>, transform_indices = @transform_6, window_bounds = array<i64: 1, 64>}, {pipeline_mode = #tpu.pipeline_mode<synchronous>, transform_indices = @transform_7, window_bounds = array<i64: 1, 64>}, {pipeline_mode = #tpu.pipeline_mode<synchronous>, transform_indices = @transform_8, window_bounds = array<i64: 1, 64>}, {pipeline_mode = #tpu.pipeline_mode<synchronous>, transform_indices = @transform_9, window_bounds = array<i64: 64, 128>}, {pipeline_mode = #tpu.pipeline_mode<synchronous>, transform_indices = @transform_10, window_bounds = array<i64: 1, 128>}, {pipeline_mode = #tpu.pipeline_mode<synchronous>, transform_indices = @transform_11, window_bounds = array<i64: 128, 64>}, {pipeline_mode = #tpu.pipeline_mode<synchronous>, transform_indices = @transform_12, window_bounds = array<i64: 1, 64>}, {transform_indices = @transform_13, window_bounds = array<i64: 1, 20, 64>}]} {
    %c0 = arith.constant 0 : index
    %c0_0 = arith.constant 0 : index
    %c0_1 = arith.constant 0 : index
    %0 = vector.load %arg1[%c0, %c0_0, %c0_1] : memref<1x20x64xf32, #tpu.memory_space<vmem>>, vector<1x20x64xf32>
    %1 = vector.shape_cast %0 : vector<1x20x64xf32> to vector<20x64xf32>
    %c0_2 = arith.constant 0 : index
    %c0_3 = arith.constant 0 : index
    %2 = vector.load %arg2[%c0_2, %c0_3] : memref<1x64xf32, #tpu.memory_space<vmem>>, vector<1x64xf32>
    %c0_4 = arith.constant 0 : index
    %c0_5 = arith.constant 0 : index
    %3 = vector.load %arg3[%c0_4, %c0_5] : memref<1x64xf32, #tpu.memory_space<vmem>>, vector<1x64xf32>
    %cst = arith.constant dense<0.000000e+00> : vector<20xf32>
    %4 = vector.multi_reduction <add>, %1, %cst [1] : vector<20x64xf32> to vector<20xf32>
    %5 = vector.shape_cast %4 : vector<20xf32> to vector<20x1xf32>
    %cst_6 = arith.constant 6.400000e+01 : f32
    %6 = vector.broadcast %cst_6 : f32 to vector<20x1xf32>
    %7 = arith.divf %5, %6 : vector<20x1xf32>
    %8 = vector.broadcast %7 : vector<20x1xf32> to vector<20x64xf32>
    %9 = arith.subf %1, %8 : vector<20x64xf32>
    %10 = arith.mulf %9, %9 : vector<20x64xf32>
    %cst_7 = arith.constant dense<0.000000e+00> : vector<20xf32>
    %11 = vector.multi_reduction <add>, %10, %cst_7 [1] : vector<20x64xf32> to vector<20xf32>
    %12 = vector.shape_cast %11 : vector<20xf32> to vector<20x1xf32>
    %cst_8 = arith.constant 6.400000e+01 : f32
    %13 = vector.broadcast %cst_8 : f32 to vector<20x1xf32>
    %14 = arith.divf %12, %13 : vector<20x1xf32>
    %15 = vector.broadcast %7 : vector<20x1xf32> to vector<20x64xf32>
    %16 = arith.subf %1, %15 : vector<20x64xf32>
    %cst_9 = arith.constant 9.99999974E-6 : f32
    %17 = vector.broadcast %cst_9 : f32 to vector<20x1xf32>
    %18 = arith.addf %14, %17 : vector<20x1xf32>
    %19 = math.rsqrt %18 : vector<20x1xf32>
    %20 = vector.broadcast %19 : vector<20x1xf32> to vector<20x64xf32>
    %21 = arith.mulf %16, %20 : vector<20x64xf32>
    %22 = vector.broadcast %2 : vector<1x64xf32> to vector<20x64xf32>
    %23 = arith.mulf %21, %22 : vector<20x64xf32>
    %24 = vector.broadcast %3 : vector<1x64xf32> to vector<20x64xf32>
    %25 = arith.addf %23, %24 : vector<20x64xf32>
    %c0_10 = arith.constant 0 : index
    %c0_11 = arith.constant 0 : index
    %26 = vector.load %arg4[%c0_10, %c0_11] : memref<64x192xf32, #tpu.memory_space<vmem>>, vector<64x192xf32>
    %cst_12 = arith.constant dense<0.000000e+00> : vector<20x192xf32>
    %27 = tpu.matmul %25, %26, %cst_12 {dimension_numbers = #tpu.dot_dimension_numbers<[1], [0], [0], [1], [0, 0, 1, 1], [], []>} : vector<20x64xf32>, vector<64x192xf32>, vector<20x192xf32> -> vector<20x192xf32>
    %c0_13 = arith.constant 0 : index
    %c0_14 = arith.constant 0 : index
    %28 = vector.load %arg5[%c0_13, %c0_14] : memref<1x192xf32, #tpu.memory_space<vmem>>, vector<1x192xf32>
    %29 = vector.broadcast %28 : vector<1x192xf32> to vector<20x192xf32>
    %30 = arith.addf %27, %29 : vector<20x192xf32>
    %31 = vector.extract_strided_slice %30 {offsets = [0, 0], sizes = [20, 64], strides = [1, 1]} : vector<20x192xf32> to vector<20x64xf32>
    %32 = vector.extract_strided_slice %30 {offsets = [0, 64], sizes = [20, 64], strides = [1, 1]} : vector<20x192xf32> to vector<20x64xf32>
    %33 = vector.extract_strided_slice %30 {offsets = [0, 128], sizes = [20, 64], strides = [1, 1]} : vector<20x192xf32> to vector<20x64xf32>
    %34 = vector.extract_strided_slice %31 {offsets = [0, 0], sizes = [20, 16], strides = [1, 1]} : vector<20x64xf32> to vector<20x16xf32>
    %35 = vector.extract_strided_slice %32 {offsets = [0, 0], sizes = [20, 16], strides = [1, 1]} : vector<20x64xf32> to vector<20x16xf32>
    %36 = vector.extract_strided_slice %33 {offsets = [0, 0], sizes = [20, 16], strides = [1, 1]} : vector<20x64xf32> to vector<20x16xf32>
    %cst_15 = arith.constant dense<0.000000e+00> : vector<20x20xf32>
    %37 = tpu.matmul %34, %35, %cst_15 {dimension_numbers = #tpu.dot_dimension_numbers<[1], [1], [0], [0], [0, 0, 1, 0], [], []>} : vector<20x16xf32>, vector<20x16xf32>, vector<20x20xf32> -> vector<20x20xf32>
    %cst_16 = arith.constant 2.500000e-01 : f32
    %38 = vector.broadcast %cst_16 : f32 to vector<20x20xf32>
    %39 = arith.mulf %37, %38 : vector<20x20xf32>
    %cst_17 = arith.constant dense<0xFF800000> : vector<20xf32>
    %40 = vector.multi_reduction <maximumf>, %39, %cst_17 [1] : vector<20x20xf32> to vector<20xf32>
    %41 = vector.shape_cast %40 : vector<20xf32> to vector<20x1xf32>
    %42 = vector.broadcast %41 : vector<20x1xf32> to vector<20x20xf32>
    %43 = arith.subf %39, %42 : vector<20x20xf32>
    %44 = math.exp %43 : vector<20x20xf32>
    %cst_18 = arith.constant dense<0.000000e+00> : vector<20xf32>
    %45 = vector.multi_reduction <add>, %44, %cst_18 [1] : vector<20x20xf32> to vector<20xf32>
    %46 = vector.shape_cast %45 : vector<20xf32> to vector<20x1xf32>
    %47 = tpu.reciprocal %46 {approx = true} : vector<20x1xf32> -> vector<20x1xf32>
    %48 = vector.broadcast %47 : vector<20x1xf32> to vector<20x20xf32>
    %49 = arith.mulf %44, %48 : vector<20x20xf32>
    %cst_19 = arith.constant dense<0.000000e+00> : vector<20x16xf32>
    %50 = tpu.matmul %49, %36, %cst_19 {dimension_numbers = #tpu.dot_dimension_numbers<[1], [0], [0], [1], [0, 0, 1, 1], [], []>} : vector<20x20xf32>, vector<20x16xf32>, vector<20x16xf32> -> vector<20x16xf32>
    %51 = vector.extract_strided_slice %31 {offsets = [0, 16], sizes = [20, 16], strides = [1, 1]} : vector<20x64xf32> to vector<20x16xf32>
    %52 = vector.extract_strided_slice %32 {offsets = [0, 16], sizes = [20, 16], strides = [1, 1]} : vector<20x64xf32> to vector<20x16xf32>
    %53 = vector.extract_strided_slice %33 {offsets = [0, 16], sizes = [20, 16], strides = [1, 1]} : vector<20x64xf32> to vector<20x16xf32>
    %cst_20 = arith.constant dense<0.000000e+00> : vector<20x20xf32>
    %54 = tpu.matmul %51, %52, %cst_20 {dimension_numbers = #tpu.dot_dimension_numbers<[1], [1], [0], [0], [0, 0, 1, 0], [], []>} : vector<20x16xf32>, vector<20x16xf32>, vector<20x20xf32> -> vector<20x20xf32>
    %cst_21 = arith.constant 2.500000e-01 : f32
    %55 = vector.broadcast %cst_21 : f32 to vector<20x20xf32>
    %56 = arith.mulf %54, %55 : vector<20x20xf32>
    %cst_22 = arith.constant dense<0xFF800000> : vector<20xf32>
    %57 = vector.multi_reduction <maximumf>, %56, %cst_22 [1] : vector<20x20xf32> to vector<20xf32>
    %58 = vector.shape_cast %57 : vector<20xf32> to vector<20x1xf32>
    %59 = vector.broadcast %58 : vector<20x1xf32> to vector<20x20xf32>
    %60 = arith.subf %56, %59 : vector<20x20xf32>
    %61 = math.exp %60 : vector<20x20xf32>
    %cst_23 = arith.constant dense<0.000000e+00> : vector<20xf32>
    %62 = vector.multi_reduction <add>, %61, %cst_23 [1] : vector<20x20xf32> to vector<20xf32>
    %63 = vector.shape_cast %62 : vector<20xf32> to vector<20x1xf32>
    %64 = tpu.reciprocal %63 {approx = true} : vector<20x1xf32> -> vector<20x1xf32>
    %65 = vector.broadcast %64 : vector<20x1xf32> to vector<20x20xf32>
    %66 = arith.mulf %61, %65 : vector<20x20xf32>
    %cst_24 = arith.constant dense<0.000000e+00> : vector<20x16xf32>
    %67 = tpu.matmul %66, %53, %cst_24 {dimension_numbers = #tpu.dot_dimension_numbers<[1], [0], [0], [1], [0, 0, 1, 1], [], []>} : vector<20x20xf32>, vector<20x16xf32>, vector<20x16xf32> -> vector<20x16xf32>
    %68 = vector.extract_strided_slice %31 {offsets = [0, 32], sizes = [20, 16], strides = [1, 1]} : vector<20x64xf32> to vector<20x16xf32>
    %69 = vector.extract_strided_slice %32 {offsets = [0, 32], sizes = [20, 16], strides = [1, 1]} : vector<20x64xf32> to vector<20x16xf32>
    %70 = vector.extract_strided_slice %33 {offsets = [0, 32], sizes = [20, 16], strides = [1, 1]} : vector<20x64xf32> to vector<20x16xf32>
    %cst_25 = arith.constant dense<0.000000e+00> : vector<20x20xf32>
    %71 = tpu.matmul %68, %69, %cst_25 {dimension_numbers = #tpu.dot_dimension_numbers<[1], [1], [0], [0], [0, 0, 1, 0], [], []>} : vector<20x16xf32>, vector<20x16xf32>, vector<20x20xf32> -> vector<20x20xf32>
    %cst_26 = arith.constant 2.500000e-01 : f32
    %72 = vector.broadcast %cst_26 : f32 to vector<20x20xf32>
    %73 = arith.mulf %71, %72 : vector<20x20xf32>
    %cst_27 = arith.constant dense<0xFF800000> : vector<20xf32>
    %74 = vector.multi_reduction <maximumf>, %73, %cst_27 [1] : vector<20x20xf32> to vector<20xf32>
    %75 = vector.shape_cast %74 : vector<20xf32> to vector<20x1xf32>
    %76 = vector.broadcast %75 : vector<20x1xf32> to vector<20x20xf32>
    %77 = arith.subf %73, %76 : vector<20x20xf32>
    %78 = math.exp %77 : vector<20x20xf32>
    %cst_28 = arith.constant dense<0.000000e+00> : vector<20xf32>
    %79 = vector.multi_reduction <add>, %78, %cst_28 [1] : vector<20x20xf32> to vector<20xf32>
    %80 = vector.shape_cast %79 : vector<20xf32> to vector<20x1xf32>
    %81 = tpu.reciprocal %80 {approx = true} : vector<20x1xf32> -> vector<20x1xf32>
    %82 = vector.broadcast %81 : vector<20x1xf32> to vector<20x20xf32>
    %83 = arith.mulf %78, %82 : vector<20x20xf32>
    %cst_29 = arith.constant dense<0.000000e+00> : vector<20x16xf32>
    %84 = tpu.matmul %83, %70, %cst_29 {dimension_numbers = #tpu.dot_dimension_numbers<[1], [0], [0], [1], [0, 0, 1, 1], [], []>} : vector<20x20xf32>, vector<20x16xf32>, vector<20x16xf32> -> vector<20x16xf32>
    %85 = vector.extract_strided_slice %31 {offsets = [0, 48], sizes = [20, 16], strides = [1, 1]} : vector<20x64xf32> to vector<20x16xf32>
    %86 = vector.extract_strided_slice %32 {offsets = [0, 48], sizes = [20, 16], strides = [1, 1]} : vector<20x64xf32> to vector<20x16xf32>
    %87 = vector.extract_strided_slice %33 {offsets = [0, 48], sizes = [20, 16], strides = [1, 1]} : vector<20x64xf32> to vector<20x16xf32>
    %cst_30 = arith.constant dense<0.000000e+00> : vector<20x20xf32>
    %88 = tpu.matmul %85, %86, %cst_30 {dimension_numbers = #tpu.dot_dimension_numbers<[1], [1], [0], [0], [0, 0, 1, 0], [], []>} : vector<20x16xf32>, vector<20x16xf32>, vector<20x20xf32> -> vector<20x20xf32>
    %cst_31 = arith.constant 2.500000e-01 : f32
    %89 = vector.broadcast %cst_31 : f32 to vector<20x20xf32>
    %90 = arith.mulf %88, %89 : vector<20x20xf32>
    %cst_32 = arith.constant dense<0xFF800000> : vector<20xf32>
    %91 = vector.multi_reduction <maximumf>, %90, %cst_32 [1] : vector<20x20xf32> to vector<20xf32>
    %92 = vector.shape_cast %91 : vector<20xf32> to vector<20x1xf32>
    %93 = vector.broadcast %92 : vector<20x1xf32> to vector<20x20xf32>
    %94 = arith.subf %90, %93 : vector<20x20xf32>
    %95 = math.exp %94 : vector<20x20xf32>
    %cst_33 = arith.constant dense<0.000000e+00> : vector<20xf32>
    %96 = vector.multi_reduction <add>, %95, %cst_33 [1] : vector<20x20xf32> to vector<20xf32>
    %97 = vector.shape_cast %96 : vector<20xf32> to vector<20x1xf32>
    %98 = tpu.reciprocal %97 {approx = true} : vector<20x1xf32> -> vector<20x1xf32>
    %99 = vector.broadcast %98 : vector<20x1xf32> to vector<20x20xf32>
    %100 = arith.mulf %95, %99 : vector<20x20xf32>
    %cst_34 = arith.constant dense<0.000000e+00> : vector<20x16xf32>
    %101 = tpu.matmul %100, %87, %cst_34 {dimension_numbers = #tpu.dot_dimension_numbers<[1], [0], [0], [1], [0, 0, 1, 1], [], []>} : vector<20x20xf32>, vector<20x16xf32>, vector<20x16xf32> -> vector<20x16xf32>
    %102 = tpu.concatenate %50, %67, %84, %101 in 1 : vector<20x16xf32>, vector<20x16xf32>, vector<20x16xf32>, vector<20x16xf32> -> vector<20x64xf32>
    %c0_35 = arith.constant 0 : index
    %c0_36 = arith.constant 0 : index
    %103 = vector.load %arg6[%c0_35, %c0_36] : memref<64x64xf32, #tpu.memory_space<vmem>>, vector<64x64xf32>
    %cst_37 = arith.constant dense<0.000000e+00> : vector<20x64xf32>
    %104 = tpu.matmul %102, %103, %cst_37 {dimension_numbers = #tpu.dot_dimension_numbers<[1], [0], [0], [1], [0, 0, 1, 1], [], []>} : vector<20x64xf32>, vector<64x64xf32>, vector<20x64xf32> -> vector<20x64xf32>
    %105 = arith.addf %1, %104 : vector<20x64xf32>
    %c0_38 = arith.constant 0 : index
    %c0_39 = arith.constant 0 : index
    %106 = vector.load %arg7[%c0_38, %c0_39] : memref<1x64xf32, #tpu.memory_space<vmem>>, vector<1x64xf32>
    %107 = vector.broadcast %106 : vector<1x64xf32> to vector<20x64xf32>
    %108 = arith.addf %105, %107 : vector<20x64xf32>
    %c0_40 = arith.constant 0 : index
    %c0_41 = arith.constant 0 : index
    %109 = vector.load %arg8[%c0_40, %c0_41] : memref<1x64xf32, #tpu.memory_space<vmem>>, vector<1x64xf32>
    %c0_42 = arith.constant 0 : index
    %c0_43 = arith.constant 0 : index
    %110 = vector.load %arg9[%c0_42, %c0_43] : memref<1x64xf32, #tpu.memory_space<vmem>>, vector<1x64xf32>
    %cst_44 = arith.constant dense<0.000000e+00> : vector<20xf32>
    %111 = vector.multi_reduction <add>, %108, %cst_44 [1] : vector<20x64xf32> to vector<20xf32>
    %112 = vector.shape_cast %111 : vector<20xf32> to vector<20x1xf32>
    %cst_45 = arith.constant 6.400000e+01 : f32
    %113 = vector.broadcast %cst_45 : f32 to vector<20x1xf32>
    %114 = arith.divf %112, %113 : vector<20x1xf32>
    %115 = vector.broadcast %114 : vector<20x1xf32> to vector<20x64xf32>
    %116 = arith.subf %108, %115 : vector<20x64xf32>
    %117 = arith.mulf %116, %116 : vector<20x64xf32>
    %cst_46 = arith.constant dense<0.000000e+00> : vector<20xf32>
    %118 = vector.multi_reduction <add>, %117, %cst_46 [1] : vector<20x64xf32> to vector<20xf32>
    %119 = vector.shape_cast %118 : vector<20xf32> to vector<20x1xf32>
    %cst_47 = arith.constant 6.400000e+01 : f32
    %120 = vector.broadcast %cst_47 : f32 to vector<20x1xf32>
    %121 = arith.divf %119, %120 : vector<20x1xf32>
    %122 = vector.broadcast %114 : vector<20x1xf32> to vector<20x64xf32>
    %123 = arith.subf %108, %122 : vector<20x64xf32>
    %cst_48 = arith.constant 9.99999974E-6 : f32
    %124 = vector.broadcast %cst_48 : f32 to vector<20x1xf32>
    %125 = arith.addf %121, %124 : vector<20x1xf32>
    %126 = math.rsqrt %125 : vector<20x1xf32>
    %127 = vector.broadcast %126 : vector<20x1xf32> to vector<20x64xf32>
    %128 = arith.mulf %123, %127 : vector<20x64xf32>
    %129 = vector.broadcast %109 : vector<1x64xf32> to vector<20x64xf32>
    %130 = arith.mulf %128, %129 : vector<20x64xf32>
    %131 = vector.broadcast %110 : vector<1x64xf32> to vector<20x64xf32>
    %132 = arith.addf %130, %131 : vector<20x64xf32>
    %c0_49 = arith.constant 0 : index
    %c0_50 = arith.constant 0 : index
    %133 = vector.load %arg10[%c0_49, %c0_50] : memref<64x128xf32, #tpu.memory_space<vmem>>, vector<64x128xf32>
    %cst_51 = arith.constant dense<0.000000e+00> : vector<20x128xf32>
    %134 = tpu.matmul %132, %133, %cst_51 {dimension_numbers = #tpu.dot_dimension_numbers<[1], [0], [0], [1], [0, 0, 1, 1], [], []>} : vector<20x64xf32>, vector<64x128xf32>, vector<20x128xf32> -> vector<20x128xf32>
    %c0_52 = arith.constant 0 : index
    %c0_53 = arith.constant 0 : index
    %135 = vector.load %arg11[%c0_52, %c0_53] : memref<1x128xf32, #tpu.memory_space<vmem>>, vector<1x128xf32>
    %136 = vector.broadcast %135 : vector<1x128xf32> to vector<20x128xf32>
    %137 = arith.addf %134, %136 : vector<20x128xf32>
    %138 = arith.mulf %137, %137 : vector<20x128xf32>
    %139 = arith.mulf %137, %138 : vector<20x128xf32>
    %cst_54 = arith.constant 4.471500e-02 : f32
    %140 = vector.broadcast %cst_54 : f32 to vector<20x128xf32>
    %141 = arith.mulf %140, %139 : vector<20x128xf32>
    %142 = arith.addf %137, %141 : vector<20x128xf32>
    %cst_55 = arith.constant 0.797884583 : f32
    %143 = vector.broadcast %cst_55 : f32 to vector<20x128xf32>
    %144 = arith.mulf %143, %142 : vector<20x128xf32>
    %145 = math.tanh %144 : vector<20x128xf32>
    %cst_56 = arith.constant 1.000000e+00 : f32
    %146 = vector.broadcast %cst_56 : f32 to vector<20x128xf32>
    %147 = arith.addf %146, %145 : vector<20x128xf32>
    %cst_57 = arith.constant 5.000000e-01 : f32
    %148 = vector.broadcast %cst_57 : f32 to vector<20x128xf32>
    %149 = arith.mulf %148, %147 : vector<20x128xf32>
    %150 = arith.mulf %137, %149 : vector<20x128xf32>
    %c0_58 = arith.constant 0 : index
    %c0_59 = arith.constant 0 : index
    %151 = vector.load %arg12[%c0_58, %c0_59] : memref<128x64xf32, #tpu.memory_space<vmem>>, vector<128x64xf32>
    %cst_60 = arith.constant dense<0.000000e+00> : vector<20x64xf32>
    %152 = tpu.matmul %150, %151, %cst_60 {dimension_numbers = #tpu.dot_dimension_numbers<[1], [0], [0], [1], [0, 0, 1, 1], [], []>} : vector<20x128xf32>, vector<128x64xf32>, vector<20x64xf32> -> vector<20x64xf32>
    %153 = arith.addf %108, %152 : vector<20x64xf32>
    %c0_61 = arith.constant 0 : index
    %c0_62 = arith.constant 0 : index
    %154 = vector.load %arg13[%c0_61, %c0_62] : memref<1x64xf32, #tpu.memory_space<vmem>>, vector<1x64xf32>
    %155 = vector.broadcast %154 : vector<1x64xf32> to vector<20x64xf32>
    %156 = arith.addf %153, %155 : vector<20x64xf32>
    %c0_63 = arith.constant 0 : index
    %c0_64 = arith.constant 0 : index
    %c0_65 = arith.constant 0 : index
    %157 = vector.load %arg14[%c0_63, %c0_64, %c0_65] : memref<1x20x64xf32, #tpu.memory_space<vmem>>, vector<1x20x64xf32>
    %158 = vector.shape_cast %157 : vector<1x20x64xf32> to vector<20x64xf32>
    %159 = vector.shape_cast %156 : vector<20x64xf32> to vector<1x20x64xf32>
    tpu.vector_store %arg14[%c0_63, %c0_64, %c0_65], %159 {strides = array<i32>} : memref<1x20x64xf32, #tpu.memory_space<vmem>>, vector<1x20x64xf32>,
    return
  }
  func.func @transform_0(%arg0: i32) -> (i32, i32, i32) {
    %c0_i32 = arith.constant 0 : i32
    %c0_i32_0 = arith.constant 0 : i32
    %c0_i32_1 = arith.constant 0 : i32
    return %arg0, %c0_i32, %c0_i32_0 : i32, i32, i32
  }
  func.func @transform_1(%arg0: i32) -> (i32, i32) {
    %c0_i32 = arith.constant 0 : i32
    %c0_i32_0 = arith.constant 0 : i32
    %c0_i32_1 = arith.constant 0 : i32
    return %c0_i32, %c0_i32_0 : i32, i32
  }
  func.func @transform_2(%arg0: i32) -> (i32, i32) {
    %c0_i32 = arith.constant 0 : i32
    %c0_i32_0 = arith.constant 0 : i32
    %c0_i32_1 = arith.constant 0 : i32
    return %c0_i32, %c0_i32_0 : i32, i32
  }
  func.func @transform_3(%arg0: i32) -> (i32, i32) {
    %c0_i32 = arith.constant 0 : i32
    %c0_i32_0 = arith.constant 0 : i32
    %c0_i32_1 = arith.constant 0 : i32
    return %c0_i32, %c0_i32_0 : i32, i32
  }
  func.func @transform_4(%arg0: i32) -> (i32, i32) {
    %c0_i32 = arith.constant 0 : i32
    %c0_i32_0 = arith.constant 0 : i32
    %c0_i32_1 = arith.constant 0 : i32
    return %c0_i32, %c0_i32_0 : i32, i32
  }
  func.func @transform_5(%arg0: i32) -> (i32, i32) {
    %c0_i32 = arith.constant 0 : i32
    %c0_i32_0 = arith.constant 0 : i32
    %c0_i32_1 = arith.constant 0 : i32
    return %c0_i32, %c0_i32_0 : i32, i32
  }
  func.func @transform_6(%arg0: i32) -> (i32, i32) {
    %c0_i32 = arith.constant 0 : i32
    %c0_i32_0 = arith.constant 0 : i32
    %c0_i32_1 = arith.constant 0 : i32
    return %c0_i32, %c0_i32_0 : i32, i32
  }
  func.func @transform_7(%arg0: i32) -> (i32, i32) {
    %c0_i32 = arith.constant 0 : i32
    %c0_i32_0 = arith.constant 0 : i32
    %c0_i32_1 = arith.constant 0 : i32
    return %c0_i32, %c0_i32_0 : i32, i32
  }
  func.func @transform_8(%arg0: i32) -> (i32, i32) {
    %c0_i32 = arith.constant 0 : i32
    %c0_i32_0 = arith.constant 0 : i32
    %c0_i32_1 = arith.constant 0 : i32
    return %c0_i32, %c0_i32_0 : i32, i32
  }
  func.func @transform_9(%arg0: i32) -> (i32, i32) {
    %c0_i32 = arith.constant 0 : i32
    %c0_i32_0 = arith.constant 0 : i32
    %c0_i32_1 = arith.constant 0 : i32
    return %c0_i32, %c0_i32_0 : i32, i32
  }
  func.func @transform_10(%arg0: i32) -> (i32, i32) {
    %c0_i32 = arith.constant 0 : i32
    %c0_i32_0 = arith.constant 0 : i32
    %c0_i32_1 = arith.constant 0 : i32
    return %c0_i32, %c0_i32_0 : i32, i32
  }
  func.func @transform_11(%arg0: i32) -> (i32, i32) {
    %c0_i32 = arith.constant 0 : i32
    %c0_i32_0 = arith.constant 0 : i32
    %c0_i32_1 = arith.constant 0 : i32
    return %c0_i32, %c0_i32_0 : i32, i32
  }
  func.func @transform_12(%arg0: i32) -> (i32, i32) {
    %c0_i32 = arith.constant 0 : i32
    %c0_i32_0 = arith.constant 0 : i32
    %c0_i32_1 = arith.constant 0 : i32
    return %c0_i32, %c0_i32_0 : i32, i32
  }
  func.func @transform_13(%arg0: i32) -> (i32, i32, i32) {
    %c0_i32 = arith.constant 0 : i32
    %c0_i32_0 = arith.constant 0 : i32
    %c0_i32_1 = arith.constant 0 : i32
    return %arg0, %c0_i32, %c0_i32_0 : i32, i32, i32
  }
}

module attributes {stable_mosaic.version = 11 : i64} {
  func.func @_proj_norm_kernel(%arg0: i32, %arg1: memref<1x20x64xf32, #tpu.memory_space<vmem>>, %arg2: memref<64x32xf32, #tpu.memory_space<vmem>>, %arg3: memref<1x32xf32, #tpu.memory_space<vmem>>, %arg4: memref<1x32xf32, #tpu.memory_space<vmem>>, %arg5: memref<1x32xf32, #tpu.memory_space<vmem>>, %arg6: memref<1x20x32xf32, #tpu.memory_space<vmem>>) attributes {dimension_semantics = [#tpu.dimension_semantics<parallel>], iteration_bounds = array<i64: 2>, scalar_prefetch = 0 : i64, scratch_operands = 0 : i64, tpu.core_type = #tpu.core_type<tc>, window_params = [{transform_indices = @transform_0, window_bounds = array<i64: 1, 20, 64>}, {pipeline_mode = #tpu.pipeline_mode<synchronous>, transform_indices = @transform_1, window_bounds = array<i64: 64, 32>}, {pipeline_mode = #tpu.pipeline_mode<synchronous>, transform_indices = @transform_2, window_bounds = array<i64: 1, 32>}, {pipeline_mode = #tpu.pipeline_mode<synchronous>, transform_indices = @transform_3, window_bounds = array<i64: 1, 32>}, {pipeline_mode = #tpu.pipeline_mode<synchronous>, transform_indices = @transform_4, window_bounds = array<i64: 1, 32>}, {transform_indices = @transform_5, window_bounds = array<i64: 1, 20, 32>}]} {
    %c0 = arith.constant 0 : index
    %c0_0 = arith.constant 0 : index
    %c0_1 = arith.constant 0 : index
    %0 = vector.load %arg1[%c0, %c0_0, %c0_1] : memref<1x20x64xf32, #tpu.memory_space<vmem>>, vector<1x20x64xf32>
    %1 = vector.shape_cast %0 : vector<1x20x64xf32> to vector<20x64xf32>
    %c0_2 = arith.constant 0 : index
    %c0_3 = arith.constant 0 : index
    %2 = vector.load %arg2[%c0_2, %c0_3] : memref<64x32xf32, #tpu.memory_space<vmem>>, vector<64x32xf32>
    %cst = arith.constant dense<0.000000e+00> : vector<20x32xf32>
    %3 = tpu.matmul %1, %2, %cst {dimension_numbers = #tpu.dot_dimension_numbers<[1], [0], [0], [1], [0, 0, 1, 1], [], []>} : vector<20x64xf32>, vector<64x32xf32>, vector<20x32xf32> -> vector<20x32xf32>
    %c0_4 = arith.constant 0 : index
    %c0_5 = arith.constant 0 : index
    %4 = vector.load %arg3[%c0_4, %c0_5] : memref<1x32xf32, #tpu.memory_space<vmem>>, vector<1x32xf32>
    %5 = vector.broadcast %4 : vector<1x32xf32> to vector<20x32xf32>
    %6 = arith.addf %3, %5 : vector<20x32xf32>
    %c0_6 = arith.constant 0 : index
    %c0_7 = arith.constant 0 : index
    %7 = vector.load %arg4[%c0_6, %c0_7] : memref<1x32xf32, #tpu.memory_space<vmem>>, vector<1x32xf32>
    %c0_8 = arith.constant 0 : index
    %c0_9 = arith.constant 0 : index
    %8 = vector.load %arg5[%c0_8, %c0_9] : memref<1x32xf32, #tpu.memory_space<vmem>>, vector<1x32xf32>
    %cst_10 = arith.constant dense<0.000000e+00> : vector<20xf32>
    %9 = vector.multi_reduction <add>, %6, %cst_10 [1] : vector<20x32xf32> to vector<20xf32>
    %10 = vector.shape_cast %9 : vector<20xf32> to vector<20x1xf32>
    %cst_11 = arith.constant 3.200000e+01 : f32
    %11 = vector.broadcast %cst_11 : f32 to vector<20x1xf32>
    %12 = arith.divf %10, %11 : vector<20x1xf32>
    %13 = vector.broadcast %12 : vector<20x1xf32> to vector<20x32xf32>
    %14 = arith.subf %6, %13 : vector<20x32xf32>
    %15 = arith.mulf %14, %14 : vector<20x32xf32>
    %cst_12 = arith.constant dense<0.000000e+00> : vector<20xf32>
    %16 = vector.multi_reduction <add>, %15, %cst_12 [1] : vector<20x32xf32> to vector<20xf32>
    %17 = vector.shape_cast %16 : vector<20xf32> to vector<20x1xf32>
    %cst_13 = arith.constant 3.200000e+01 : f32
    %18 = vector.broadcast %cst_13 : f32 to vector<20x1xf32>
    %19 = arith.divf %17, %18 : vector<20x1xf32>
    %20 = vector.broadcast %12 : vector<20x1xf32> to vector<20x32xf32>
    %21 = arith.subf %6, %20 : vector<20x32xf32>
    %cst_14 = arith.constant 9.99999974E-6 : f32
    %22 = vector.broadcast %cst_14 : f32 to vector<20x1xf32>
    %23 = arith.addf %19, %22 : vector<20x1xf32>
    %24 = math.rsqrt %23 : vector<20x1xf32>
    %25 = vector.broadcast %24 : vector<20x1xf32> to vector<20x32xf32>
    %26 = arith.mulf %21, %25 : vector<20x32xf32>
    %27 = vector.broadcast %7 : vector<1x32xf32> to vector<20x32xf32>
    %28 = arith.mulf %26, %27 : vector<20x32xf32>
    %29 = vector.broadcast %8 : vector<1x32xf32> to vector<20x32xf32>
    %30 = arith.addf %28, %29 : vector<20x32xf32>
    %c0_15 = arith.constant 0 : index
    %c0_16 = arith.constant 0 : index
    %c0_17 = arith.constant 0 : index
    %31 = vector.load %arg6[%c0_15, %c0_16, %c0_17] : memref<1x20x32xf32, #tpu.memory_space<vmem>>, vector<1x20x32xf32>
    %32 = vector.shape_cast %31 : vector<1x20x32xf32> to vector<20x32xf32>
    %33 = vector.shape_cast %30 : vector<20x32xf32> to vector<1x20x32xf32>
    tpu.vector_store %arg6[%c0_15, %c0_16, %c0_17], %33 {strides = array<i32>} : memref<1x20x32xf32, #tpu.memory_space<vmem>>, vector<1x20x32xf32>,
    return
  }
  func.func @transform_0(%arg0: i32) -> (i32, i32, i32) {
    %c0_i32 = arith.constant 0 : i32
    %c0_i32_0 = arith.constant 0 : i32
    %c0_i32_1 = arith.constant 0 : i32
    return %arg0, %c0_i32, %c0_i32_0 : i32, i32, i32
  }
  func.func @transform_1(%arg0: i32) -> (i32, i32) {
    %c0_i32 = arith.constant 0 : i32
    %c0_i32_0 = arith.constant 0 : i32
    %c0_i32_1 = arith.constant 0 : i32
    return %c0_i32, %c0_i32_0 : i32, i32
  }
  func.func @transform_2(%arg0: i32) -> (i32, i32) {
    %c0_i32 = arith.constant 0 : i32
    %c0_i32_0 = arith.constant 0 : i32
    %c0_i32_1 = arith.constant 0 : i32
    return %c0_i32, %c0_i32_0 : i32, i32
  }
  func.func @transform_3(%arg0: i32) -> (i32, i32) {
    %c0_i32 = arith.constant 0 : i32
    %c0_i32_0 = arith.constant 0 : i32
    %c0_i32_1 = arith.constant 0 : i32
    return %c0_i32, %c0_i32_0 : i32, i32
  }
  func.func @transform_4(%arg0: i32) -> (i32, i32) {
    %c0_i32 = arith.constant 0 : i32
    %c0_i32_0 = arith.constant 0 : i32
    %c0_i32_1 = arith.constant 0 : i32
    return %c0_i32, %c0_i32_0 : i32, i32
  }
  func.func @transform_5(%arg0: i32) -> (i32, i32, i32) {
    %c0_i32 = arith.constant 0 : i32
    %c0_i32_0 = arith.constant 0 : i32
    %c0_i32_1 = arith.constant 0 : i32
    return %arg0, %c0_i32, %c0_i32_0 : i32, i32, i32
  }
}

</mosaic_0001>

<llo_original>
// kernel: tr_glove_forward.5
$region0: #{tr_glove_forward.5}
  #allocation0 [shape = 'u32[]', space=smem, size = 0x4, offset = 0x4, fixed_abs, tag = 'smem constant byte address 0x4 - core index']
  #allocation1 [shape = 'u32[144,128]{1,0:T(1,128)}', space=vmem, size = 0x12000, scoped, tag = 'internal scratch']
  %s0 = inlined_call_operand.vmem [shape: f32[2,20,64], index: 0, kind: input, shape index: {}]
  %s1 = inlined_call_operand.vmem [shape: f32[64,32], index: 1, kind: input, shape index: {}]
  %s2 = inlined_call_operand.vmem [shape: f32[1,32], index: 2, kind: input, shape index: {}]
  %s3 = inlined_call_operand.vmem [shape: f32[1,32], index: 3, kind: input, shape index: {}]
  %s4 = inlined_call_operand.vmem [shape: f32[1,32], index: 4, kind: input, shape index: {}]
  %s5 = inlined_call_operand.vmem [shape: f32[2,20,32], index: 5, kind: output, shape index: {}]
  %s6 = sld [smem:[#allocation0]]
  $region53: #{tr_glove_forward.5} parent=0
    _
  %s8 = ssub.s32 1, %s6
  %s9 = scalar_select 0, %s8, %s6
  loop: start=0, step=1, limit=4
  $region2: #{tr_glove_forward.5} parent=0 // loop_pre_header
    _
  $region3: #{tr_glove_forward.5} parent=0 // loop_header
    %s11 = sphi 0, %s15
    %p12 = scmp.ge.s32.totalorder %s11, 4
    %s21 = sphi 0, %s23
    %s24 = sphi 0, %s21
    %s25 = sphi 0, %s24
    %s41 = sphi 0, %s25
    %s45 = sphi 0, %s45
    %s47 = sphi 0, %s45
    %s48 = sphi 0, %s47
    %s62 = sphi 0, %s48
    %s66 = sphi 0, %s66
    %s68 = sphi 0, %s66
    %s69 = sphi 0, %s68
    %s83 = sphi 0, %s69
    %s87 = sphi 0, %s87
    %s89 = sphi 0, %s87
    %s90 = sphi 0, %s89
    %s104 = sphi 0, %s90
    %s108 = sphi 0, %s108
    %s110 = sphi 0, %s108
    %s111 = sphi 0, %s110
    %s125 = sphi 0, %s111
    %s131 = sphi 0, %s133
    %s134 = sphi 0, %s131
    %s135 = sphi 0, %s134
    %s151 = sphi 0, %s135
  $region4: #{tr_glove_forward.5} parent=0 // loop_header_branch
    %14 = sbr.rel (%p12) target = $region8
  $region5: #{tr_glove_forward.5} parent=0 // loop_body
    %s16 = ssub.s32 %s11, 1
    %s17 = ssub.s32 %s11, 2
    %s18 = sadd.s32 %s11, 1
    %s19 = ssub.s32 %s11, %s18
    %p20 = scmp.eq.s32.totalorder %s19, 0
    %s22 = sadd.s32 %s21, 1
    %s23 = scalar_select %p20, %s21, %s22
    %p26 = pneg %p20
    %p27 = scmp.eq.s32.totalorder %s11, 1
    %p28 = por %p26, %p27
    %p29 = scmp.ne.s32.totalorder %s21, %s24
    %p30 = scmp.eq.s32.totalorder %s11, 0
    %p31 = por %p29, %p30
    %p32 = scmp.ne.s32.totalorder %s21, %s24
    %p33 = scmp.eq.s32.totalorder %s16, 1
    %p34 = por %p32, %p33
    %p35 = scmp.ne.s32.totalorder %s24, %s25
    %p36 = scmp.eq.s32.totalorder %s16, 0
    %p37 = por %p35, %p36
    %p38 = scmp.ne.s32.totalorder %s24, %s25
    %p39 = scmp.eq.s32.totalorder %s17, 1
    %p40 = por %p38, %p39
    %p42 = scmp.ne.s32.totalorder %s25, %s41
    %p43 = scmp.eq.s32.totalorder %s17, 0
    %p44 = por %p42, %p43
    %s46 = sadd.s32 %s45, 1
    %p49 = scmp.eq.s32.totalorder %s11, 1
    %p50 = scmp.ne.s32.totalorder %s45, %s47
    %p51 = scmp.eq.s32.totalorder %s11, 0
    %p52 = por %p50, %p51
    %p53 = scmp.ne.s32.totalorder %s45, %s47
    %p54 = scmp.eq.s32.totalorder %s16, 1
    %p55 = por %p53, %p54
    %p56 = scmp.ne.s32.totalorder %s47, %s48
    %p57 = scmp.eq.s32.totalorder %s16, 0
    %p58 = por %p56, %p57
    %p59 = scmp.ne.s32.totalorder %s47, %s48
    %p60 = scmp.eq.s32.totalorder %s17, 1
    %p61 = por %p59, %p60
    %p63 = scmp.ne.s32.totalorder %s48, %s62
    %p64 = scmp.eq.s32.totalorder %s17, 0
    %p65 = por %p63, %p64
    %s67 = sadd.s32 %s66, 1
    %p70 = scmp.eq.s32.totalorder %s11, 1
    %p71 = scmp.ne.s32.totalorder %s66, %s68
    %p72 = scmp.eq.s32.totalorder %s11, 0
    %p73 = por %p71, %p72
    %p74 = scmp.ne.s32.totalorder %s66, %s68
    %p75 = scmp.eq.s32.totalorder %s16, 1
    %p76 = por %p74, %p75
    %p77 = scmp.ne.s32.totalorder %s68, %s69
    %p78 = scmp.eq.s32.totalorder %s16, 0
    %p79 = por %p77, %p78
    %p80 = scmp.ne.s32.totalorder %s68, %s69
    %p81 = scmp.eq.s32.totalorder %s17, 1
    %p82 = por %p80, %p81
    %p84 = scmp.ne.s32.totalorder %s69, %s83
    %p85 = scmp.eq.s32.totalorder %s17, 0
    %p86 = por %p84, %p85
    %s88 = sadd.s32 %s87, 1
    %p91 = scmp.eq.s32.totalorder %s11, 1
    %p92 = scmp.ne.s32.totalorder %s87, %s89
    %p93 = scmp.eq.s32.totalorder %s11, 0
    %p94 = por %p92, %p93
    %p95 = scmp.ne.s32.totalorder %s87, %s89
    %p96 = scmp.eq.s32.totalorder %s16, 1
    %p97 = por %p95, %p96
    %p98 = scmp.ne.s32.totalorder %s89, %s90
    %p99 = scmp.eq.s32.totalorder %s16, 0
    %p100 = por %p98, %p99
    %p101 = scmp.ne.s32.totalorder %s89, %s90
    %p102 = scmp.eq.s32.totalorder %s17, 1
    %p103 = por %p101, %p102
    %p105 = scmp.ne.s32.totalorder %s90, %s104
    %p106 = scmp.eq.s32.totalorder %s17, 0
    %p107 = por %p105, %p106
    %s109 = sadd.s32 %s108, 1
    %p112 = scmp.eq.s32.totalorder %s11, 1
    %p113 = scmp.ne.s32.totalorder %s108, %s110
    %p114 = scmp.eq.s32.totalorder %s11, 0
    %p115 = por %p113, %p114
    %p116 = scmp.ne.s32.totalorder %s108, %s110
    %p117 = scmp.eq.s32.totalorder %s16, 1
    %p118 = por %p116, %p117
    %p119 = scmp.ne.s32.totalorder %s110, %s111
    %p120 = scmp.eq.s32.totalorder %s16, 0
    %p121 = por %p119, %p120
    %p122 = scmp.ne.s32.totalorder %s110, %s111
    %p123 = scmp.eq.s32.totalorder %s17, 1
    %p124 = por %p122, %p123
    %p126 = scmp.ne.s32.totalorder %s111, %s125
    %p127 = scmp.eq.s32.totalorder %s17, 0
    %p128 = por %p126, %p127
    %s129 = ssub.s32 %s11, %s18
    %p130 = scmp.eq.s32.totalorder %s129, 0
    %s132 = sadd.s32 %s131, 1
    %s133 = scalar_select %p130, %s131, %s132
    %p136 = pneg %p130
    %p137 = scmp.eq.s32.totalorder %s11, 1
    %p138 = por %p136, %p137
    %p139 = scmp.ne.s32.totalorder %s131, %s134
    %p140 = scmp.eq.s32.totalorder %s11, 0
    %p141 = por %p139, %p140
    %p142 = scmp.ne.s32.totalorder %s131, %s134
    %p143 = scmp.eq.s32.totalorder %s16, 1
    %p144 = por %p142, %p143
    %p145 = scmp.ne.s32.totalorder %s134, %s135
    %p146 = scmp.eq.s32.totalorder %s16, 0
    %p147 = por %p145, %p146
    %p148 = scmp.ne.s32.totalorder %s134, %s135
    %p149 = scmp.eq.s32.totalorder %s17, 1
    %p150 = por %p148, %p149
    %p152 = scmp.ne.s32.totalorder %s135, %s151
    %p153 = scmp.eq.s32.totalorder %s17, 0
    %p154 = por %p152, %p153
    %p155 = scmp.le.s32.totalorder 1, %s11
    %p156 = scmp.lt.s32.totalorder %s11, 3
    %p157 = pnand %p155, %p156
    %p158 = pneg %p157
    // Predicated region
    $region9: #{tr_glove_forward.5} parent=5 // pred_check
      _
    $region10: #{tr_glove_forward.5} parent=5 // pred_check_branch
      %160 = sbr.rel (%p157) target = $region12
    $region11: #{tr_glove_forward.5} parent=5 // pred_region
      %s161 = ssub.s32 %s11, 1
      // Predicated region
      $region13: #{tr_glove_forward.5} parent=11 // pred_check
        %p162 = pneg %p58
      $region14: #{tr_glove_forward.5} parent=11 // pred_check_branch
        %164 = sbr.rel (%p162) target = $region16
      $region15: #{tr_glove_forward.5} parent=11 // pred_region
        _
      $region16: #{tr_glove_forward.5} parent=11 // pred_fallthru
        _
      // Predicated region
      $region17: #{tr_glove_forward.5} parent=11 // pred_check
        %p165 = pneg %p79
      $region18: #{tr_glove_forward.5} parent=11 // pred_check_branch
        %167 = sbr.rel (%p165) target = $region20
      $region19: #{tr_glove_forward.5} parent=11 // pred_region
        _
      $region20: #{tr_glove_forward.5} parent=11 // pred_fallthru
        _
      // Predicated region
      $region21: #{tr_glove_forward.5} parent=11 // pred_check
        %p168 = pneg %p100
      $region22: #{tr_glove_forward.5} parent=11 // pred_check_branch
        %170 = sbr.rel (%p168) target = $region24
      $region23: #{tr_glove_forward.5} parent=11 // pred_region
        _
      $region24: #{tr_glove_forward.5} parent=11 // pred_fallthru
        _
      // Predicated region
      $region25: #{tr_glove_forward.5} parent=11 // pred_check
        %p171 = pneg %p121
      $region26: #{tr_glove_forward.5} parent=11 // pred_check_branch
        %173 = sbr.rel (%p171) target = $region28
      $region27: #{tr_glove_forward.5} parent=11 // pred_region
        _
      $region28: #{tr_glove_forward.5} parent=11 // pred_fallthru
        _
    $region12: #{tr_glove_forward.5} parent=5 // pred_fallthru
      _
    %p174 = scmp.lt.s32.totalorder %s11, 2
    // Predicated region
    $region29: #{tr_glove_forward.5} parent=5 // pred_check
      %p175 = pneg %p174
    $region30: #{tr_glove_forward.5} parent=5 // pred_check_branch
      %177 = sbr.rel (%p175) target = $region32
    $region31: #{tr_glove_forward.5} parent=5 // pred_region
      // Predicated region
      $region33: #{tr_glove_forward.5} parent=31 // pred_check
        %p178 = pneg %p31
      $region34: #{tr_glove_forward.5} parent=31 // pred_check_branch
        %180 = sbr.rel (%p178) target = $region36
      $region35: #{tr_glove_forward.5} parent=31 // pred_region
        %p181 = scmp.lt.s32.totalorder %s11, 1
        %s182 = scalar_select %p181, %s11, 1
        %s183 = smul.addr %s182, 3
        %s184 = smul.addr %s183, 8
        %s185 = scalar_lea.vmem %s0, %s184
      $region36: #{tr_glove_forward.5} parent=31 // pred_fallthru
        _
    $region32: #{tr_glove_forward.5} parent=5 // pred_fallthru
      _
    %p186 = scmp.le.s32.totalorder 1, %s11
    %p187 = scmp.lt.s32.totalorder %s11, 3
    %p188 = pnand %p186, %p187
    %p189 = pneg %p188
    // Predicated region
    $region37: #{tr_glove_forward.5} parent=5 // pred_check
      _
    $region38: #{tr_glove_forward.5} parent=5 // pred_check_branch
      %191 = sbr.rel (%p188) target = $region40
    $region39: #{tr_glove_forward.5} parent=5 // pred_region
      %s192 = ssub.s32 %s11, 1
      %p193 = scmp.lt.s32.totalorder %s16, 1
      %s194 = scalar_select %p193, %s16, 1
      %s195 = smul.addr %s194, 3
      %s196 = smul.addr %s195, 8
      %s197 = scalar_lea.vmem %s0, %s196
      %p198 = pneg %p37
      %p199 = pneg %p34
      %p200 = pneg %p58
      %p201 = pneg %p55
      %p202 = pneg %p79
      %p203 = pneg %p76
      %p204 = pneg %p100
      %p205 = pneg %p97
      %p206 = pneg %p121
      %p207 = pneg %p118
      %p208 = pneg %p147
      %p209 = pneg %p144
      %p210 = scmp.lt.s32.totalorder %s16, 1
      %s211 = scalar_select %p210, %s16, 1
      %s212 = smul.addr %s211, 3
      %s213 = smul.addr %s212, 8
      %s214 = scalar_lea.vmem %s5, %s213
      %p215 = scmp.lt.s32.totalorder %s16, 1
      %s216 = scalar_select %p215, %s16, 1
      %s217 = smul.addr %s216, 3
      %s218 = smul.addr %s217, 8
      %s219 = scalar_lea.vmem %s0, %s218
      %p220 = scmp.lt.s32.totalorder %s16, 1
      %s221 = scalar_select %p220, %s16, 1
      %s222 = smul.addr %s221, 3
      %s223 = smul.addr %s222, 8
      %s224 = scalar_lea.vmem %s5, %s223
      %v225 = vld [vmem:[%s219] sm:$0xff]
      %v226 = vld [vmem:[%s219 + $0x8] sm:$0xff]
      %v227 = vld [vmem:[%s219 + $0x10] sm:$0xf]
      %v228 = vld [vmem:[%s1] sm:$0xff]
      %v229 = vld [vmem:[%s1 + $0x8] sm:$0xff]
      %v230 = vld [vmem:[%s1 + $0x10] sm:$0xff]
      %v231 = vld [vmem:[%s1 + $0x18] sm:$0xff]
      %v232 = vld [vmem:[%s1 + $0x20] sm:$0xff]
      %v233 = vld [vmem:[%s1 + $0x28] sm:$0xff]
      %v234 = vld [vmem:[%s1 + $0x30] sm:$0xff]
      %v235 = vld [vmem:[%s1 + $0x38] sm:$0xff]
      %v236 = vld [vmem:[%s2] sm:$0x1]
      %v238 = vlaneseq
      %v239 = vshrl.u32 %v238, 7
      %v240 = vsub.s32 0, %v239
      %v241 = vrot.slane %v236, %v240
      %vm243 = vcmask 523264
      %v245 = vsel %vm243, %v225, 0
      %v248 = vsel %vm243, %v226, 0
      %v251 = vsel %vm243, %v227, 0
      %253 = vmatprep.subr.mxu0 0.0
      %254 = vmatpush1.msra.mxu0 %v228
      %255 = vmatprep.subr.mxu0 0.0
      %256 = vmatpush1.msra.mxu0 %v229
      %257 = vmatprep.subr.mxu0 0.0
      %258 = vmatpush1.msra.mxu0 %v230
      %259 = vmatprep.subr.mxu0 0.0
      %260 = vmatpush1.msra.mxu0 %v231
      %261 = vmatprep.subr.mxu0 0.0
      %262 = vmatpush1.msra.mxu0 %v232
      %263 = vmatprep.subr.mxu0 0.0
      %264 = vmatpush1.msra.mxu0 %v233
      %265 = vmatprep.subr.mxu0 0.0
      %266 = vmatpush1.msra.mxu0 %v234
      %267 = vmatprep.subr.mxu0 0.0
      %268 = vmatpush1.msra.mxu0 %v235
      %269 = vmatprep.subr.mxu0 0.0
      %270 = vmatpush1.msra.mxu0 0.0
      %271 = vmatprep.subr.mxu0 0.0
      %272 = vmatpush1.msra.mxu0 0.0
      %273 = vmatprep.subr.mxu0 0.0
      %274 = vmatpush1.msra.mxu0 0.0
      %275 = vmatprep.subr.mxu0 0.0
      %276 = vmatpush1.msra.mxu0 0.0
      %277 = vmatprep.subr.mxu0 0.0
      %278 = vmatpush1.msra.mxu0 0.0
      %279 = vmatprep.subr.mxu0 0.0
      %280 = vmatpush1.msra.mxu0 0.0
      %281 = vmatprep.subr.mxu0 0.0
      %282 = vmatpush1.msra.mxu0 0.0
      %283 = vmatprep.subr.mxu0 0.0
      %284 = vmatpush1.msra.mxu0 0.0
      %285 = vmatprep.subr.mxu0 0.0
      %286 = vmatpush1.msra.mxu0 0.0
      %287 = vmatprep.subr.mxu0 0.0
      %288 = vmatpush1.msra.mxu0 0.0
      %289 = vmatprep.subr.mxu0 0.0
      %290 = vmatpush1.msra.mxu0 0.0
      %291 = vmatprep.subr.mxu0 0.0
      %292 = vmatpush1.msra.mxu0 0.0
      %293 = vmatprep.subr.mxu0 0.0
      %294 = vmatpush1.msra.mxu0 0.0
      %295 = vmatprep.subr.mxu0 0.0
      %296 = vmatpush1.msra.mxu0 0.0
      %297 = vmatprep.subr.mxu0 0.0
      %298 = vmatpush1.msra.mxu0 0.0
      %299 = vmatprep.subr.mxu0 0.0
      %300 = vmatpush1.msra.mxu0 0.0
      %301 = vmatprep.subr.mxu0 0.0
      %302 = vmatpush1.msra.mxu0 0.0
      %303 = vmatprep.subr.mxu0 0.0
      %304 = vmatpush1.msra.mxu0 0.0
      %305 = vmatprep.subr.mxu0 0.0
      %306 = vmatpush1.msra.mxu0 0.0
      %307 = vmatprep.subr.mxu0 0.0
      %308 = vmatpush1.msra.mxu0 0.0
      %309 = vmatprep.subr.mxu0 0.0
      %310 = vmatpush1.msra.mxu0 0.0
      %311 = vmatprep.subr.mxu0 0.0
      %312 = vmatpush1.msra.mxu0 0.0
      %313 = vmatprep.subr.mxu0 0.0
      %314 = vmatpush1.msra.mxu0 0.0
      %315 = vmatprep.subr.mxu0 0.0
      %316 = vmatpush1.msra.mxu0 0.0
      %317 = vmatprep.mubr.f32.mxu0 0.0
      %318 = vmatmul.mubr.f32.gmra.mrb[0].mxu0 %v245
      %v319 = vpop.f32.mrb[0].mxu0
      %v320 = vadd.f32 %v241, %v319
      %v321 = vpop.f32.mrb[0].mxu0
      %322 = vmatprep.mubr.f32.mxu0 0.0
      %323 = vmatmul.mubr.f32.gmra.mrb[0].mxu0 %v248
      %v324 = vpop.f32.mrb[0].mxu0
      %v325 = vadd.f32 %v241, %v324
      %v326 = vpop.f32.mrb[0].mxu0
      %327 = vmatprep.mubr.f32.mxu0 0.0
      %328 = vmatmul.mubr.f32.gmra.mrb[0].mxu0 %v251
      %v329 = vpop.f32.mrb[0].mxu0
      %v330 = vadd.f32 %v241, %v329
      %v331 = vpop.f32.mrb[0].mxu0
      %332 = vdwg.mxu0
      %v333 = vld [vmem:[%s3] sm:$0x1]
      %v334 = vld [vmem:[%s4] sm:$0x1]
      %vm335 = vcmask 261120
      %v336 = vsel %vm335, %v320, 0.0
      %337 = vadd.xlane.f32.xlu0 %v336
      %v338 = vpop.xlane.xlu0 %337
      %v339 = vsel %vm335, %v325, 0.0
      %340 = vadd.xlane.f32.xlu0 %v339
      %v341 = vpop.xlane.xlu0 %340
      %vm342 = vcmask 257024
      %v343 = vsel %vm342, %v330, 0.0
      %344 = vadd.xlane.f32.xlu0 %v343
      %v345 = vpop.xlane.xlu0 %344
      %v346 = vrcp.pop 32.0
      %v347 = vmul.f32 %v338, %v346
      %v348 = vmul.f32 %v341, %v346
      %v349 = vmul.f32 %v345, %v346
      %v350 = vsub.f32 %v320, %v347
      %v351 = vsub.f32 %v325, %v348
      %v352 = vsub.f32 %v330, %v349
      %v353 = vmul.f32 %v350, %v350
      %v354 = vmul.f32 %v351, %v351
      %v355 = vmul.f32 %v352, %v352
      %v356 = vsel %vm335, %v353, 0.0
      %357 = vadd.xlane.f32.xlu0 %v356
      %v358 = vpop.xlane.xlu0 %357
      %v359 = vsel %vm335, %v354, 0.0
      %360 = vadd.xlane.f32.xlu0 %v359
      %v361 = vpop.xlane.xlu0 %360
      %v362 = vsel %vm342, %v355, 0.0
      %363 = vadd.xlane.f32.xlu0 %v362
      %v364 = vpop.xlane.xlu0 %363
      %v365 = vmul.f32 %v358, %v346
      %v366 = vmul.f32 %v361, %v346
      %v367 = vmul.f32 %v364, %v346
      %v368 = vadd.f32 %v365, 1e-05
      %v369 = vadd.f32 %v366, 1e-05
      %v370 = vadd.f32 %v367, 1e-05
      %v371 = vrsqrt.pop %v368
      %v372 = vrsqrt.pop %v369
      %v373 = vrsqrt.pop %v370
      %v374 = vmul.f32 %v350, %v371
      %v375 = vmul.f32 %v351, %v372
      %v376 = vmul.f32 %v352, %v373
      %v378 = vlaneseq
      %v379 = vshrl.u32 %v378, 7
      %v380 = vsub.s32 0, %v379
      %v381 = vrot.slane %v333, %v380
      %v383 = vmul.f32 %v374, %v381
      %v384 = vmul.f32 %v375, %v381
      %v385 = vmul.f32 %v376, %v381
      %v387 = vlaneseq
      %v388 = vshrl.u32 %v387, 7
      %v389 = vsub.s32 0, %v388
      %v390 = vrot.slane %v334, %v389
      %v392 = vadd.f32 %v383, %v390
      %v393 = vadd.f32 %v384, %v390
      %v394 = vadd.f32 %v385, %v390
      %395 = vst.msk [vmem:[%s224] sm:$0xff] %vm335, %v392
      %396 = vst.msk [vmem:[%s224 + $0x8] sm:$0xff] %vm335, %v393
      %397 = vst.msk [vmem:[%s224 + $0x10] sm:$0xf] %vm342, %v394
      %p398 = scmp.lt.s32.totalorder %s16, 1
      %s399 = scalar_select %p398, %s16, 1
      %s400 = smul.addr %s399, 3
      %s401 = smul.addr %s400, 8
      %s402 = scalar_lea.vmem %s5, %s401
      // Predicated region
      $region41: #{tr_glove_forward.5} parent=39 // pred_check
        %p403 = pneg %p144
      $region42: #{tr_glove_forward.5} parent=39 // pred_check_branch
        %405 = sbr.rel (%p403) target = $region44
      $region43: #{tr_glove_forward.5} parent=39 // pred_region
        _
      $region44: #{tr_glove_forward.5} parent=39 // pred_fallthru
        _
    $region40: #{tr_glove_forward.5} parent=5 // pred_fallthru
      _
    %p406 = scmp.le.s32.totalorder 2, %s11
    // Predicated region
    $region45: #{tr_glove_forward.5} parent=5 // pred_check
      %p407 = pneg %p406
    $region46: #{tr_glove_forward.5} parent=5 // pred_check_branch
      %409 = sbr.rel (%p407) target = $region48
    $region47: #{tr_glove_forward.5} parent=5 // pred_region
      %s410 = ssub.s32 %s11, 2
      // Predicated region
      $region49: #{tr_glove_forward.5} parent=47 // pred_check
        %p411 = pneg %p150
      $region50: #{tr_glove_forward.5} parent=47 // pred_check_branch
        %413 = sbr.rel (%p411) target = $region52
      $region51: #{tr_glove_forward.5} parent=47 // pred_region
        %p414 = scmp.lt.s32.totalorder %s17, 1
        %s415 = scalar_select %p414, %s17, 1
        %s416 = smul.addr %s415, 3
        %s417 = smul.addr %s416, 8
        %s418 = scalar_lea.vmem %s5, %s417
      $region52: #{tr_glove_forward.5} parent=47 // pred_fallthru
        _
    $region48: #{tr_glove_forward.5} parent=5 // pred_fallthru
      _
  $region6: #{tr_glove_forward.5} parent=0 // loop_footer
    %s15 = sadd.s32 1, %s11
  $region7: #{tr_glove_forward.5} parent=0 // loop_footer_branch
    %10 = sbr.rel target = $region3
  $region8: #{tr_glove_forward.5} parent=0 // loop_exit
    _

// kernel: tr_glove_forward.3
$region0: #{tr_glove_forward.3}
  #allocation0 [shape = 'u32[]', space=smem, size = 0x4, offset = 0x4, fixed_abs, tag = 'smem constant byte address 0x4 - core index']
  #allocation1 [shape = 'u32[144,128]{1,0:T(1,128)}', space=vmem, size = 0x12000, scoped, tag = 'internal scratch']
  %s0 = inlined_call_operand.vmem [shape: f32[2,20,64], index: 0, kind: input, shape index: {}]
  %s1 = inlined_call_operand.vmem [shape: f32[1,64], index: 1, kind: input, shape index: {}]
  %s2 = inlined_call_operand.vmem [shape: f32[1,64], index: 2, kind: input, shape index: {}]
  %s3 = inlined_call_operand.vmem [shape: f32[64,192], index: 3, kind: input, shape index: {}]
  %s4 = inlined_call_operand.vmem [shape: f32[1,192], index: 4, kind: input, shape index: {}]
  %s5 = inlined_call_operand.vmem [shape: f32[64,64], index: 5, kind: input, shape index: {}]
  %s6 = inlined_call_operand.vmem [shape: f32[1,64], index: 6, kind: input, shape index: {}]
  %s7 = inlined_call_operand.vmem [shape: f32[1,64], index: 7, kind: input, shape index: {}]
  %s8 = inlined_call_operand.vmem [shape: f32[1,64], index: 8, kind: input, shape index: {}]
  %s9 = inlined_call_operand.vmem [shape: f32[64,128], index: 9, kind: input, shape index: {}]
  %s10 = inlined_call_operand.vmem [shape: f32[1,128], index: 10, kind: input, shape index: {}]
  %s11 = inlined_call_operand.vmem [shape: f32[128,64], index: 11, kind: input, shape index: {}]
  %s12 = inlined_call_operand.vmem [shape: f32[1,64], index: 12, kind: input, shape index: {}]
  %s13 = inlined_call_operand.vmem [shape: f32[2,20,64], index: 13, kind: output, shape index: {}]
  %s14 = sld [smem:[#allocation0]]
  $region85: #{tr_glove_forward.3} parent=0
    _
  %s16 = ssub.s32 1, %s14
  %s17 = scalar_select 0, %s16, %s14
  loop: start=0, step=1, limit=4
  $region2: #{tr_glove_forward.3} parent=0 // loop_pre_header
    _
  $region3: #{tr_glove_forward.3} parent=0 // loop_header
    %s19 = sphi 0, %s23
    %p20 = scmp.ge.s32.totalorder %s19, 4
    %s29 = sphi 0, %s31
    %s32 = sphi 0, %s29
    %s33 = sphi 0, %s32
    %s49 = sphi 0, %s33
    %s53 = sphi 0, %s53
    %s55 = sphi 0, %s53
    %s56 = sphi 0, %s55
    %s70 = sphi 0, %s56
    %s74 = sphi 0, %s74
    %s76 = sphi 0, %s74
    %s77 = sphi 0, %s76
    %s91 = sphi 0, %s77
    %s95 = sphi 0, %s95
    %s97 = sphi 0, %s95
    %s98 = sphi 0, %s97
    %s112 = sphi 0, %s98
    %s116 = sphi 0, %s116
    %s118 = sphi 0, %s116
    %s119 = sphi 0, %s118
    %s133 = sphi 0, %s119
    %s137 = sphi 0, %s137
    %s139 = sphi 0, %s137
    %s140 = sphi 0, %s139
    %s154 = sphi 0, %s140
    %s158 = sphi 0, %s158
    %s160 = sphi 0, %s158
    %s161 = sphi 0, %s160
    %s175 = sphi 0, %s161
    %s179 = sphi 0, %s179
    %s181 = sphi 0, %s179
    %s182 = sphi 0, %s181
    %s196 = sphi 0, %s182
    %s200 = sphi 0, %s200
    %s202 = sphi 0, %s200
    %s203 = sphi 0, %s202
    %s217 = sphi 0, %s203
    %s221 = sphi 0, %s221
    %s223 = sphi 0, %s221
    %s224 = sphi 0, %s223
    %s238 = sphi 0, %s224
    %s242 = sphi 0, %s242
    %s244 = sphi 0, %s242
    %s245 = sphi 0, %s244
    %s259 = sphi 0, %s245
    %s263 = sphi 0, %s263
    %s265 = sphi 0, %s263
    %s266 = sphi 0, %s265
    %s280 = sphi 0, %s266
    %s284 = sphi 0, %s284
    %s286 = sphi 0, %s284
    %s287 = sphi 0, %s286
    %s301 = sphi 0, %s287
    %s307 = sphi 0, %s309
    %s310 = sphi 0, %s307
    %s311 = sphi 0, %s310
    %s327 = sphi 0, %s311
  $region4: #{tr_glove_forward.3} parent=0 // loop_header_branch
    %22 = sbr.rel (%p20) target = $region8
  $region5: #{tr_glove_forward.3} parent=0 // loop_body
    %s24 = ssub.s32 %s19, 1
    %s25 = ssub.s32 %s19, 2
    %s26 = sadd.s32 %s19, 1
    %s27 = ssub.s32 %s19, %s26
    %p28 = scmp.eq.s32.totalorder %s27, 0
    %s30 = sadd.s32 %s29, 1
    %s31 = scalar_select %p28, %s29, %s30
    %p34 = pneg %p28
    %p35 = scmp.eq.s32.totalorder %s19, 1
    %p36 = por %p34, %p35
    %p37 = scmp.ne.s32.totalorder %s29, %s32
    %p38 = scmp.eq.s32.totalorder %s19, 0
    %p39 = por %p37, %p38
    %p40 = scmp.ne.s32.totalorder %s29, %s32
    %p41 = scmp.eq.s32.totalorder %s24, 1
    %p42 = por %p40, %p41
    %p43 = scmp.ne.s32.totalorder %s32, %s33
    %p44 = scmp.eq.s32.totalorder %s24, 0
    %p45 = por %p43, %p44
    %p46 = scmp.ne.s32.totalorder %s32, %s33
    %p47 = scmp.eq.s32.totalorder %s25, 1
    %p48 = por %p46, %p47
    %p50 = scmp.ne.s32.totalorder %s33, %s49
    %p51 = scmp.eq.s32.totalorder %s25, 0
    %p52 = por %p50, %p51
    %s54 = sadd.s32 %s53, 1
    %p57 = scmp.eq.s32.totalorder %s19, 1
    %p58 = scmp.ne.s32.totalorder %s53, %s55
    %p59 = scmp.eq.s32.totalorder %s19, 0
    %p60 = por %p58, %p59
    %p61 = scmp.ne.s32.totalorder %s53, %s55
    %p62 = scmp.eq.s32.totalorder %s24, 1
    %p63 = por %p61, %p62
    %p64 = scmp.ne.s32.totalorder %s55, %s56
    %p65 = scmp.eq.s32.totalorder %s24, 0
    %p66 = por %p64, %p65
    %p67 = scmp.ne.s32.totalorder %s55, %s56
    %p68 = scmp.eq.s32.totalorder %s25, 1
    %p69 = por %p67, %p68
    %p71 = scmp.ne.s32.totalorder %s56, %s70
    %p72 = scmp.eq.s32.totalorder %s25, 0
    %p73 = por %p71, %p72
    %s75 = sadd.s32 %s74, 1
    %p78 = scmp.eq.s32.totalorder %s19, 1
    %p79 = scmp.ne.s32.totalorder %s74, %s76
    %p80 = scmp.eq.s32.totalorder %s19, 0
    %p81 = por %p79, %p80
    %p82 = scmp.ne.s32.totalorder %s74, %s76
    %p83 = scmp.eq.s32.totalorder %s24, 1
    %p84 = por %p82, %p83
    %p85 = scmp.ne.s32.totalorder %s76, %s77
    %p86 = scmp.eq.s32.totalorder %s24, 0
    %p87 = por %p85, %p86
    %p88 = scmp.ne.s32.totalorder %s76, %s77
    %p89 = scmp.eq.s32.totalorder %s25, 1
    %p90 = por %p88, %p89
    %p92 = scmp.ne.s32.totalorder %s77, %s91
    %p93 = scmp.eq.s32.totalorder %s25, 0
    %p94 = por %p92, %p93
    %s96 = sadd.s32 %s95, 1
    %p99 = scmp.eq.s32.totalorder %s19, 1
    %p100 = scmp.ne.s32.totalorder %s95, %s97
    %p101 = scmp.eq.s32.totalorder %s19, 0
    %p102 = por %p100, %p101
    %p103 = scmp.ne.s32.totalorder %s95, %s97
    %p104 = scmp.eq.s32.totalorder %s24, 1
    %p105 = por %p103, %p104
    %p106 = scmp.ne.s32.totalorder %s97, %s98
    %p107 = scmp.eq.s32.totalorder %s24, 0
    %p108 = por %p106, %p107
    %p109 = scmp.ne.s32.totalorder %s97, %s98
    %p110 = scmp.eq.s32.totalorder %s25, 1
    %p111 = por %p109, %p110
    %p113 = scmp.ne.s32.totalorder %s98, %s112
    %p114 = scmp.eq.s32.totalorder %s25, 0
    %p115 = por %p113, %p114
    %s117 = sadd.s32 %s116, 1
    %p120 = scmp.eq.s32.totalorder %s19, 1
    %p121 = scmp.ne.s32.totalorder %s116, %s118
    %p122 = scmp.eq.s32.totalorder %s19, 0
    %p123 = por %p121, %p122
    %p124 = scmp.ne.s32.totalorder %s116, %s118
    %p125 = scmp.eq.s32.totalorder %s24, 1
    %p126 = por %p124, %p125
    %p127 = scmp.ne.s32.totalorder %s118, %s119
    %p128 = scmp.eq.s32.totalorder %s24, 0
    %p129 = por %p127, %p128
    %p130 = scmp.ne.s32.totalorder %s118, %s119
    %p131 = scmp.eq.s32.totalorder %s25, 1
    %p132 = por %p130, %p131
    %p134 = scmp.ne.s32.totalorder %s119, %s133
    %p135 = scmp.eq.s32.totalorder %s25, 0
    %p136 = por %p134, %p135
    %s138 = sadd.s32 %s137, 1
    %p141 = scmp.eq.s32.totalorder %s19, 1
    %p142 = scmp.ne.s32.totalorder %s137, %s139
    %p143 = scmp.eq.s32.totalorder %s19, 0
    %p144 = por %p142, %p143
    %p145 = scmp.ne.s32.totalorder %s137, %s139
    %p146 = scmp.eq.s32.totalorder %s24, 1
    %p147 = por %p145, %p146
    %p148 = scmp.ne.s32.totalorder %s139, %s140
    %p149 = scmp.eq.s32.totalorder %s24, 0
    %p150 = por %p148, %p149
    %p151 = scmp.ne.s32.totalorder %s139, %s140
    %p152 = scmp.eq.s32.totalorder %s25, 1
    %p153 = por %p151, %p152
    %p155 = scmp.ne.s32.totalorder %s140, %s154
    %p156 = scmp.eq.s32.totalorder %s25, 0
    %p157 = por %p155, %p156
    %s159 = sadd.s32 %s158, 1
    %p162 = scmp.eq.s32.totalorder %s19, 1
    %p163 = scmp.ne.s32.totalorder %s158, %s160
    %p164 = scmp.eq.s32.totalorder %s19, 0
    %p165 = por %p163, %p164
    %p166 = scmp.ne.s32.totalorder %s158, %s160
    %p167 = scmp.eq.s32.totalorder %s24, 1
    %p168 = por %p166, %p167
    %p169 = scmp.ne.s32.totalorder %s160, %s161
    %p170 = scmp.eq.s32.totalorder %s24, 0
    %p171 = por %p169, %p170
    %p172 = scmp.ne.s32.totalorder %s160, %s161
    %p173 = scmp.eq.s32.totalorder %s25, 1
    %p174 = por %p172, %p173
    %p176 = scmp.ne.s32.totalorder %s161, %s175
    %p177 = scmp.eq.s32.totalorder %s25, 0
    %p178 = por %p176, %p177
    %s180 = sadd.s32 %s179, 1
    %p183 = scmp.eq.s32.totalorder %s19, 1
    %p184 = scmp.ne.s32.totalorder %s179, %s181
    %p185 = scmp.eq.s32.totalorder %s19, 0
    %p186 = por %p184, %p185
    %p187 = scmp.ne.s32.totalorder %s179, %s181
    %p188 = scmp.eq.s32.totalorder %s24, 1
    %p189 = por %p187, %p188
    %p190 = scmp.ne.s32.totalorder %s181, %s182
    %p191 = scmp.eq.s32.totalorder %s24, 0
    %p192 = por %p190, %p191
    %p193 = scmp.ne.s32.totalorder %s181, %s182
    %p194 = scmp.eq.s32.totalorder %s25, 1
    %p195 = por %p193, %p194
    %p197 = scmp.ne.s32.totalorder %s182, %s196
    %p198 = scmp.eq.s32.totalorder %s25, 0
    %p199 = por %p197, %p198
    %s201 = sadd.s32 %s200, 1
    %p204 = scmp.eq.s32.totalorder %s19, 1
    %p205 = scmp.ne.s32.totalorder %s200, %s202
    %p206 = scmp.eq.s32.totalorder %s19, 0
    %p207 = por %p205, %p206
    %p208 = scmp.ne.s32.totalorder %s200, %s202
    %p209 = scmp.eq.s32.totalorder %s24, 1
    %p210 = por %p208, %p209
    %p211 = scmp.ne.s32.totalorder %s202, %s203
    %p212 = scmp.eq.s32.totalorder %s24, 0
    %p213 = por %p211, %p212
    %p214 = scmp.ne.s32.totalorder %s202, %s203
    %p215 = scmp.eq.s32.totalorder %s25, 1
    %p216 = por %p214, %p215
    %p218 = scmp.ne.s32.totalorder %s203, %s217
    %p219 = scmp.eq.s32.totalorder %s25, 0
    %p220 = por %p218, %p219
    %s222 = sadd.s32 %s221, 1
    %p225 = scmp.eq.s32.totalorder %s19, 1
    %p226 = scmp.ne.s32.totalorder %s221, %s223
    %p227 = scmp.eq.s32.totalorder %s19, 0
    %p228 = por %p226, %p227
    %p229 = scmp.ne.s32.totalorder %s221, %s223
    %p230 = scmp.eq.s32.totalorder %s24, 1
    %p231 = por %p229, %p230
    %p232 = scmp.ne.s32.totalorder %s223, %s224
    %p233 = scmp.eq.s32.totalorder %s24, 0
    %p234 = por %p232, %p233
    %p235 = scmp.ne.s32.totalorder %s223, %s224
    %p236 = scmp.eq.s32.totalorder %s25, 1
    %p237 = por %p235, %p236
    %p239 = scmp.ne.s32.totalorder %s224, %s238
    %p240 = scmp.eq.s32.totalorder %s25, 0
    %p241 = por %p239, %p240
    %s243 = sadd.s32 %s242, 1
    %p246 = scmp.eq.s32.totalorder %s19, 1
    %p247 = scmp.ne.s32.totalorder %s242, %s244
    %p248 = scmp.eq.s32.totalorder %s19, 0
    %p249 = por %p247, %p248
    %p250 = scmp.ne.s32.totalorder %s242, %s244
    %p251 = scmp.eq.s32.totalorder %s24, 1
    %p252 = por %p250, %p251
    %p253 = scmp.ne.s32.totalorder %s244, %s245
    %p254 = scmp.eq.s32.totalorder %s24, 0
    %p255 = por %p253, %p254
    %p256 = scmp.ne.s32.totalorder %s244, %s245
    %p257 = scmp.eq.s32.totalorder %s25, 1
    %p258 = por %p256, %p257
    %p260 = scmp.ne.s32.totalorder %s245, %s259
    %p261 = scmp.eq.s32.totalorder %s25, 0
    %p262 = por %p260, %p261
    %s264 = sadd.s32 %s263, 1
    %p267 = scmp.eq.s32.totalorder %s19, 1
    %p268 = scmp.ne.s32.totalorder %s263, %s265
    %p269 = scmp.eq.s32.totalorder %s19, 0
    %p270 = por %p268, %p269
    %p271 = scmp.ne.s32.totalorder %s263, %s265
    %p272 = scmp.eq.s32.totalorder %s24, 1
    %p273 = por %p271, %p272
    %p274 = scmp.ne.s32.totalorder %s265, %s266
    %p275 = scmp.eq.s32.totalorder %s24, 0
    %p276 = por %p274, %p275
    %p277 = scmp.ne.s32.totalorder %s265, %s266
    %p278 = scmp.eq.s32.totalorder %s25, 1
    %p279 = por %p277, %p278
    %p281 = scmp.ne.s32.totalorder %s266, %s280
    %p282 = scmp.eq.s32.totalorder %s25, 0
    %p283 = por %p281, %p282
    %s285 = sadd.s32 %s284, 1
    %p288 = scmp.eq.s32.totalorder %s19, 1
    %p289 = scmp.ne.s32.totalorder %s284, %s286
    %p290 = scmp.eq.s32.totalorder %s19, 0
    %p291 = por %p289, %p290
    %p292 = scmp.ne.s32.totalorder %s284, %s286
    %p293 = scmp.eq.s32.totalorder %s24, 1
    %p294 = por %p292, %p293
    %p295 = scmp.ne.s32.totalorder %s286, %s287
    %p296 = scmp.eq.s32.totalorder %s24, 0
    %p297 = por %p295, %p296
    %p298 = scmp.ne.s32.totalorder %s286, %s287
    %p299 = scmp.eq.s32.totalorder %s25, 1
    %p300 = por %p298, %p299
    %p302 = scmp.ne.s32.totalorder %s287, %s301
    %p303 = scmp.eq.s32.totalorder %s25, 0
    %p304 = por %p302, %p303
    %s305 = ssub.s32 %s19, %s26
    %p306 = scmp.eq.s32.totalorder %s305, 0
    %s308 = sadd.s32 %s307, 1
    %s309 = scalar_select %p306, %s307, %s308
    %p312 = pneg %p306
    %p313 = scmp.eq.s32.totalorder %s19, 1
    %p314 = por %p312, %p313
    %p315 = scmp.ne.s32.totalorder %s307, %s310
    %p316 = scmp.eq.s32.totalorder %s19, 0
    %p317 = por %p315, %p316
    %p318 = scmp.ne.s32.totalorder %s307, %s310
    %p319 = scmp.eq.s32.totalorder %s24, 1
    %p320 = por %p318, %p319
    %p321 = scmp.ne.s32.totalorder %s310, %s311
    %p322 = scmp.eq.s32.totalorder %s24, 0
    %p323 = por %p321, %p322
    %p324 = scmp.ne.s32.totalorder %s310, %s311
    %p325 = scmp.eq.s32.totalorder %s25, 1
    %p326 = por %p324, %p325
    %p328 = scmp.ne.s32.totalorder %s311, %s327
    %p329 = scmp.eq.s32.totalorder %s25, 0
    %p330 = por %p328, %p329
    %p331 = scmp.le.s32.totalorder 1, %s19
    %p332 = scmp.lt.s32.totalorder %s19, 3
    %p333 = pnand %p331, %p332
    %p334 = pneg %p333
    // Predicated region
    $region9: #{tr_glove_forward.3} parent=5 // pred_check
      _
    $region10: #{tr_glove_forward.3} parent=5 // pred_check_branch
      %336 = sbr.rel (%p333) target = $region12
    $region11: #{tr_glove_forward.3} parent=5 // pred_region
      %s337 = ssub.s32 %s19, 1
      // Predicated region
      $region13: #{tr_glove_forward.3} parent=11 // pred_check
        %p338 = pneg %p66
      $region14: #{tr_glove_forward.3} parent=11 // pred_check_branch
        %340 = sbr.rel (%p338) target = $region16
      $region15: #{tr_glove_forward.3} parent=11 // pred_region
        _
      $region16: #{tr_glove_forward.3} parent=11 // pred_fallthru
        _
      // Predicated region
      $region17: #{tr_glove_forward.3} parent=11 // pred_check
        %p341 = pneg %p87
      $region18: #{tr_glove_forward.3} parent=11 // pred_check_branch
        %343 = sbr.rel (%p341) target = $region20
      $region19: #{tr_glove_forward.3} parent=11 // pred_region
        _
      $region20: #{tr_glove_forward.3} parent=11 // pred_fallthru
        _
      // Predicated region
      $region21: #{tr_glove_forward.3} parent=11 // pred_check
        %p344 = pneg %p108
      $region22: #{tr_glove_forward.3} parent=11 // pred_check_branch
        %346 = sbr.rel (%p344) target = $region24
      $region23: #{tr_glove_forward.3} parent=11 // pred_region
        _
      $region24: #{tr_glove_forward.3} parent=11 // pred_fallthru
        _
      // Predicated region
      $region25: #{tr_glove_forward.3} parent=11 // pred_check
        %p347 = pneg %p129
      $region26: #{tr_glove_forward.3} parent=11 // pred_check_branch
        %349 = sbr.rel (%p347) target = $region28
      $region27: #{tr_glove_forward.3} parent=11 // pred_region
        _
      $region28: #{tr_glove_forward.3} parent=11 // pred_fallthru
        _
      // Predicated region
      $region29: #{tr_glove_forward.3} parent=11 // pred_check
        %p350 = pneg %p150
      $region30: #{tr_glove_forward.3} parent=11 // pred_check_branch
        %352 = sbr.rel (%p350) target = $region32
      $region31: #{tr_glove_forward.3} parent=11 // pred_region
        _
      $region32: #{tr_glove_forward.3} parent=11 // pred_fallthru
        _
      // Predicated region
      $region33: #{tr_glove_forward.3} parent=11 // pred_check
        %p353 = pneg %p171
      $region34: #{tr_glove_forward.3} parent=11 // pred_check_branch
        %355 = sbr.rel (%p353) target = $region36
      $region35: #{tr_glove_forward.3} parent=11 // pred_region
        _
      $region36: #{tr_glove_forward.3} parent=11 // pred_fallthru
        _
      // Predicated region
      $region37: #{tr_glove_forward.3} parent=11 // pred_check
        %p356 = pneg %p192
      $region38: #{tr_glove_forward.3} parent=11 // pred_check_branch
        %358 = sbr.rel (%p356) target = $region40
      $region39: #{tr_glove_forward.3} parent=11 // pred_region
        _
      $region40: #{tr_glove_forward.3} parent=11 // pred_fallthru
        _
      // Predicated region
      $region41: #{tr_glove_forward.3} parent=11 // pred_check
        %p359 = pneg %p213
      $region42: #{tr_glove_forward.3} parent=11 // pred_check_branch
        %361 = sbr.rel (%p359) target = $region44
      $region43: #{tr_glove_forward.3} parent=11 // pred_region
        _
      $region44: #{tr_glove_forward.3} parent=11 // pred_fallthru
        _
      // Predicated region
      $region45: #{tr_glove_forward.3} parent=11 // pred_check
        %p362 = pneg %p234
      $region46: #{tr_glove_forward.3} parent=11 // pred_check_branch
        %364 = sbr.rel (%p362) target = $region48
      $region47: #{tr_glove_forward.3} parent=11 // pred_region
        _
      $region48: #{tr_glove_forward.3} parent=11 // pred_fallthru
        _
      // Predicated region
      $region49: #{tr_glove_forward.3} parent=11 // pred_check
        %p365 = pneg %p255
      $region50: #{tr_glove_forward.3} parent=11 // pred_check_branch
        %367 = sbr.rel (%p365) target = $region52
      $region51: #{tr_glove_forward.3} parent=11 // pred_region
        _
      $region52: #{tr_glove_forward.3} parent=11 // pred_fallthru
        _
      // Predicated region
      $region53: #{tr_glove_forward.3} parent=11 // pred_check
        %p368 = pneg %p276
      $region54: #{tr_glove_forward.3} parent=11 // pred_check_branch
        %370 = sbr.rel (%p368) target = $region56
      $region55: #{tr_glove_forward.3} parent=11 // pred_region
        _
      $region56: #{tr_glove_forward.3} parent=11 // pred_fallthru
        _
      // Predicated region
      $region57: #{tr_glove_forward.3} parent=11 // pred_check
        %p371 = pneg %p297
      $region58: #{tr_glove_forward.3} parent=11 // pred_check_branch
        %373 = sbr.rel (%p371) target = $region60
      $region59: #{tr_glove_forward.3} parent=11 // pred_region
        _
      $region60: #{tr_glove_forward.3} parent=11 // pred_fallthru
        _
    $region12: #{tr_glove_forward.3} parent=5 // pred_fallthru
      _
    %p374 = scmp.lt.s32.totalorder %s19, 2
    // Predicated region
    $region61: #{tr_glove_forward.3} parent=5 // pred_check
      %p375 = pneg %p374
    $region62: #{tr_glove_forward.3} parent=5 // pred_check_branch
      %377 = sbr.rel (%p375) target = $region64
    $region63: #{tr_glove_forward.3} parent=5 // pred_region
      // Predicated region
      $region65: #{tr_glove_forward.3} parent=63 // pred_check
        %p378 = pneg %p39
      $region66: #{tr_glove_forward.3} parent=63 // pred_check_branch
        %380 = sbr.rel (%p378) target = $region68
      $region67: #{tr_glove_forward.3} parent=63 // pred_region
        %p381 = scmp.lt.s32.totalorder %s19, 1
        %s382 = scalar_select %p381, %s19, 1
        %s383 = smul.addr %s382, 3
        %s384 = smul.addr %s383, 8
        %s385 = scalar_lea.vmem %s0, %s384
      $region68: #{tr_glove_forward.3} parent=63 // pred_fallthru
        _
    $region64: #{tr_glove_forward.3} parent=5 // pred_fallthru
      _
    %p386 = scmp.le.s32.totalorder 1, %s19
    %p387 = scmp.lt.s32.totalorder %s19, 3
    %p388 = pnand %p386, %p387
    %p389 = pneg %p388
    // Predicated region
    $region69: #{tr_glove_forward.3} parent=5 // pred_check
      _
    $region70: #{tr_glove_forward.3} parent=5 // pred_check_branch
      %391 = sbr.rel (%p388) target = $region72
    $region71: #{tr_glove_forward.3} parent=5 // pred_region
      %s392 = ssub.s32 %s19, 1
      %p393 = scmp.lt.s32.totalorder %s24, 1
      %s394 = scalar_select %p393, %s24, 1
      %s395 = smul.addr %s394, 3
      %s396 = smul.addr %s395, 8
      %s397 = scalar_lea.vmem %s0, %s396
      %p398 = pneg %p45
      %p399 = pneg %p42
      %p400 = pneg %p66
      %p401 = pneg %p63
      %p402 = pneg %p87
      %p403 = pneg %p84
      %p404 = pneg %p108
      %p405 = pneg %p105
      %p406 = pneg %p129
      %p407 = pneg %p126
      %p408 = pneg %p150
      %p409 = pneg %p147
      %p410 = pneg %p171
      %p411 = pneg %p168
      %p412 = pneg %p192
      %p413 = pneg %p189
      %p414 = pneg %p213
      %p415 = pneg %p210
      %p416 = pneg %p234
      %p417 = pneg %p231
      %p418 = pneg %p255
      %p419 = pneg %p252
      %p420 = pneg %p276
      %p421 = pneg %p273
      %p422 = pneg %p297
      %p423 = pneg %p294
      %p424 = pneg %p323
      %p425 = pneg %p320
      %p426 = scmp.lt.s32.totalorder %s24, 1
      %s427 = scalar_select %p426, %s24, 1
      %s428 = smul.addr %s427, 3
      %s429 = smul.addr %s428, 8
      %s430 = scalar_lea.vmem %s13, %s429
      %p431 = scmp.lt.s32.totalorder %s24, 1
      %s432 = scalar_select %p431, %s24, 1
      %s433 = smul.addr %s432, 3
      %s434 = smul.addr %s433, 8
      %s435 = scalar_lea.vmem %s0, %s434
      %p436 = scmp.lt.s32.totalorder %s24, 1
      %s437 = scalar_select %p436, %s24, 1
      %s438 = smul.addr %s437, 3
      %s439 = smul.addr %s438, 8
      %s440 = scalar_lea.vmem %s13, %s439
      %v441 = vld [vmem:[%s435] sm:$0xff]
      %v442 = vld [vmem:[%s435 + $0x8] sm:$0xff]
      %v443 = vld [vmem:[%s435 + $0x10] sm:$0xf]
      %v444 = vld [vmem:[%s1] sm:$0x1]
      %v445 = vld [vmem:[%s2] sm:$0x1]
      %vm446 = vcmask 523264
      %v447 = vsel %vm446, %v441, 0.0
      %448 = vadd.xlane.f32.xlu0 %v447
      %v449 = vpop.xlane.xlu0 %448
      %v450 = vsel %vm446, %v442, 0.0
      %451 = vadd.xlane.f32.xlu0 %v450
      %v452 = vpop.xlane.xlu0 %451
      %vm453 = vcmask 519168
      %v454 = vsel %vm453, %v443, 0.0
      %455 = vadd.xlane.f32.xlu0 %v454
      %v456 = vpop.xlane.xlu0 %455
      %v457 = vrcp.pop 64.0
      %v458 = vmul.f32 %v449, %v457
      %v459 = vmul.f32 %v452, %v457
      %v460 = vmul.f32 %v456, %v457
      %v461 = vsub.f32 %v441, %v458
      %v462 = vsub.f32 %v442, %v459
      %v463 = vsub.f32 %v443, %v460
      %v464 = vmul.f32 %v461, %v461
      %v465 = vmul.f32 %v462, %v462
      %v466 = vmul.f32 %v463, %v463
      %v467 = vsel %vm446, %v464, 0.0
      %468 = vadd.xlane.f32.xlu0 %v467
      %v469 = vpop.xlane.xlu0 %468
      %v470 = vsel %vm446, %v465, 0.0
      %471 = vadd.xlane.f32.xlu0 %v470
      %v472 = vpop.xlane.xlu0 %471
      %v473 = vsel %vm453, %v466, 0.0
      %474 = vadd.xlane.f32.xlu0 %v473
      %v475 = vpop.xlane.xlu0 %474
      %v476 = vmul.f32 %v469, %v457
      %v477 = vmul.f32 %v472, %v457
      %v478 = vmul.f32 %v475, %v457
      %v479 = vadd.f32 %v476, 1e-05
      %v480 = vadd.f32 %v477, 1e-05
      %v481 = vadd.f32 %v478, 1e-05
      %v482 = vrsqrt.pop %v479
      %v483 = vrsqrt.pop %v480
      %v484 = vrsqrt.pop %v481
      %v485 = vmul.f32 %v461, %v482
      %v486 = vmul.f32 %v462, %v483
      %v487 = vmul.f32 %v463, %v484
      %v489 = vlaneseq
      %v490 = vshrl.u32 %v489, 7
      %v491 = vsub.s32 0, %v490
      %v492 = vrot.slane %v444, %v491
      %v494 = vmul.f32 %v485, %v492
      %v495 = vmul.f32 %v486, %v492
      %v496 = vmul.f32 %v487, %v492
      %v498 = vlaneseq
      %v499 = vshrl.u32 %v498, 7
      %v500 = vsub.s32 0, %v499
      %v501 = vrot.slane %v445, %v500
      %v503 = vadd.f32 %v494, %v501
      %v504 = vadd.f32 %v495, %v501
      %v505 = vadd.f32 %v496, %v501
      %v506 = vld [vmem:[%s3] sm:$0xff]
      %v507 = vld [vmem:[%s3 + $0x8] sm:$0xff]
      %v508 = vld [vmem:[%s3 + $0x10] sm:$0xff]
      %v509 = vld [vmem:[%s3 + $0x18] sm:$0xff]
      %v510 = vld [vmem:[%s3 + $0x20] sm:$0xff]
      %v511 = vld [vmem:[%s3 + $0x28] sm:$0xff]
      %v512 = vld [vmem:[%s3 + $0x30] sm:$0xff]
      %v513 = vld [vmem:[%s3 + $0x38] sm:$0xff]
      %v514 = vld [vmem:[%s3 + $0x40] sm:$0xff]
      %v515 = vld [vmem:[%s3 + $0x48] sm:$0xff]
      %v516 = vld [vmem:[%s3 + $0x50] sm:$0xff]
      %v517 = vld [vmem:[%s3 + $0x58] sm:$0xff]
      %v518 = vld [vmem:[%s3 + $0x60] sm:$0xff]
      %v519 = vld [vmem:[%s3 + $0x68] sm:$0xff]
      %v520 = vld [vmem:[%s3 + $0x70] sm:$0xff]
      %v521 = vld [vmem:[%s3 + $0x78] sm:$0xff]
      %v522 = vld [vmem:[%s4] sm:$0x3]
      %v524 = vlaneseq
      %v525 = vshrl.u32 %v524, 7
      %v526 = vsub.s32 0, %v525
      %v527 = vrot.slane %v522, %v526
      %v528 = vlaneseq
      %v529 = vshrl.u32 %v528, 7
      %v530 = vsub.s32 1, %v529
      %v531 = vrot.slane %v522, %v530
      %v535 = vsel %vm446, %v503, 0
      %v538 = vsel %vm446, %v504, 0
      %v541 = vsel %vm446, %v505, 0
      %543 = vmatprep.subr.mxu0 %v507
      %544 = vmatpush1.msra.mxu0 %v506
      %545 = vmatprep.subr.mxu0 %v509
      %546 = vmatpush1.msra.mxu0 %v508
      %547 = vmatprep.subr.mxu0 %v511
      %548 = vmatpush1.msra.mxu0 %v510
      %549 = vmatprep.subr.mxu0 %v513
      %550 = vmatpush1.msra.mxu0 %v512
      %551 = vmatprep.subr.mxu0 %v515
      %552 = vmatpush1.msra.mxu0 %v514
      %553 = vmatprep.subr.mxu0 %v517
      %554 = vmatpush1.msra.mxu0 %v516
      %555 = vmatprep.subr.mxu0 %v519
      %556 = vmatpush1.msra.mxu0 %v518
      %557 = vmatprep.subr.mxu0 %v521
      %558 = vmatpush1.msra.mxu0 %v520
      %559 = vmatprep.subr.mxu0 0.0
      %560 = vmatpush1.msra.mxu0 0.0
      %561 = vmatprep.subr.mxu0 0.0
      %562 = vmatpush1.msra.mxu0 0.0
      %563 = vmatprep.subr.mxu0 0.0
      %564 = vmatpush1.msra.mxu0 0.0
      %565 = vmatprep.subr.mxu0 0.0
      %566 = vmatpush1.msra.mxu0 0.0
      %567 = vmatprep.subr.mxu0 0.0
      %568 = vmatpush1.msra.mxu0 0.0
      %569 = vmatprep.subr.mxu0 0.0
      %570 = vmatpush1.msra.mxu0 0.0
      %571 = vmatprep.subr.mxu0 0.0
      %572 = vmatpush1.msra.mxu0 0.0
      %573 = vmatprep.subr.mxu0 0.0
      %574 = vmatpush1.msra.mxu0 0.0
      %575 = vmatprep.subr.mxu0 0.0
      %576 = vmatpush1.msra.mxu0 0.0
      %577 = vmatprep.subr.mxu0 0.0
      %578 = vmatpush1.msra.mxu0 0.0
      %579 = vmatprep.subr.mxu0 0.0
      %580 = vmatpush1.msra.mxu0 0.0
      %581 = vmatprep.subr.mxu0 0.0
      %582 = vmatpush1.msra.mxu0 0.0
      %583 = vmatprep.subr.mxu0 0.0
      %584 = vmatpush1.msra.mxu0 0.0
      %585 = vmatprep.subr.mxu0 0.0
      %586 = vmatpush1.msra.mxu0 0.0
      %587 = vmatprep.subr.mxu0 0.0
      %588 = vmatpush1.msra.mxu0 0.0
      %589 = vmatprep.subr.mxu0 0.0
      %590 = vmatpush1.msra.mxu0 0.0
      %591 = vmatprep.subr.mxu0 0.0
      %592 = vmatpush1.msra.mxu0 0.0
      %593 = vmatprep.subr.mxu0 0.0
      %594 = vmatpush1.msra.mxu0 0.0
      %595 = vmatprep.subr.mxu0 0.0
      %596 = vmatpush1.msra.mxu0 0.0
      %597 = vmatprep.subr.mxu0 0.0
      %598 = vmatpush1.msra.mxu0 0.0
      %599 = vmatprep.subr.mxu0 0.0
      %600 = vmatpush1.msra.mxu0 0.0
      %601 = vmatprep.subr.mxu0 0.0
      %602 = vmatpush1.msra.mxu0 0.0
      %603 = vmatprep.subr.mxu0 0.0
      %604 = vmatpush1.msra.mxu0 0.0
      %605 = vmatprep.subr.mxu0 0.0
      %606 = vmatpush1.msra.mxu0 0.0
      %607 = vmatprep.mubr.f32.mxu0 0.0
      %608 = vmatmul.mubr.f32.gmra.mrb[0].mxu0 %v535
      %v609 = vpop.f32.mrb[0].mxu0
      %v610 = vadd.f32 %v527, %v609
      %v611 = vpop.f32.mrb[0].mxu0
      %v612 = vadd.f32 %v531, %v611
      %613 = vmatprep.mubr.f32.mxu0 0.0
      %614 = vmatmul.mubr.f32.gmra.mrb[0].mxu0 %v538
      %v615 = vpop.f32.mrb[0].mxu0
      %v616 = vadd.f32 %v527, %v615
      %v617 = vpop.f32.mrb[0].mxu0
      %v618 = vadd.f32 %v531, %v617
      %619 = vmatprep.mubr.f32.mxu0 0.0
      %620 = vmatmul.mubr.f32.gmra.mrb[0].mxu0 %v541
      %v621 = vpop.f32.mrb[0].mxu0
      %v622 = vadd.f32 %v527, %v621
      %v623 = vpop.f32.mrb[0].mxu0
      %v624 = vadd.f32 %v531, %v623
      %625 = vdwg.mxu0
      %629 = vrot.lane.b32.xlu0 %v610, 64
      %v630 = vpop.permute.xlu0 %629
      %631 = vrot.lane.b32.xlu0 %v616, 64
      %v632 = vpop.permute.xlu0 %631
      %633 = vrot.lane.b32.xlu0 %v622, 64
      %v634 = vpop.permute.xlu0 %633
      %vm635 = vcmask 130048
      %v636 = vsel %vm635, %v610, 0
      %v638 = vsel %vm635, %v616, 0
      %v640 = vsel %vm635, %v622, 0
      %v642 = vsel %vm635, %v630, 0
      %v644 = vsel %vm635, %v632, 0
      %v646 = vsel %vm635, %v634, 0
      %648 = vmatprep.subr.mxu0 0.0
      %649 = vmatpush1.xpose.msra.mxu0 %v642
      %650 = vmatprep.subr.mxu0 0.0
      %651 = vmatpush1.xpose.msra.mxu0 %v644
      %652 = vmatprep.subr.mxu0 0.0
      %653 = vmatpush1.xpose.msra.mxu0 %v646
      %654 = vmatprep.subr.mxu0 0.0
      %655 = vmatpush1.xpose.msra.mxu0 0.0
      %656 = vmatprep.subr.mxu0 0.0
      %657 = vmatpush1.xpose.msra.mxu0 0.0
      %658 = vmatprep.subr.mxu0 0.0
      %659 = vmatpush1.xpose.msra.mxu0 0.0
      %660 = vmatprep.subr.mxu0 0.0
      %661 = vmatpush1.xpose.msra.mxu0 0.0
      %662 = vmatprep.subr.mxu0 0.0
      %663 = vmatpush1.xpose.msra.mxu0 0.0
      %664 = vmatprep.subr.mxu0 0.0
      %665 = vmatpush1.xpose.msra.mxu0 0.0
      %666 = vmatprep.subr.mxu0 0.0
      %667 = vmatpush1.xpose.msra.mxu0 0.0
      %668 = vmatprep.subr.mxu0 0.0
      %669 = vmatpush1.xpose.msra.mxu0 0.0
      %670 = vmatprep.subr.mxu0 0.0
      %671 = vmatpush1.xpose.msra.mxu0 0.0
      %672 = vmatprep.subr.mxu0 0.0
      %673 = vmatpush1.xpose.msra.mxu0 0.0
      %674 = vmatprep.subr.mxu0 0.0
      %675 = vmatpush1.xpose.msra.mxu0 0.0
      %676 = vmatprep.subr.mxu0 0.0
      %677 = vmatpush1.xpose.msra.mxu0 0.0
      %678 = vmatprep.subr.mxu0 0.0
      %679 = vmatpush1.xpose.msra.mxu0 0.0
      %680 = vmatprep.subr.mxu0 0.0
      %681 = vmatpush1.xpose.msra.mxu0 0.0
      %682 = vmatprep.subr.mxu0 0.0
      %683 = vmatpush1.xpose.msra.mxu0 0.0
      %684 = vmatprep.subr.mxu0 0.0
      %685 = vmatpush1.xpose.msra.mxu0 0.0
      %686 = vmatprep.subr.mxu0 0.0
      %687 = vmatpush1.xpose.msra.mxu0 0.0
      %688 = vmatprep.subr.mxu0 0.0
      %689 = vmatpush1.xpose.msra.mxu0 0.0
      %690 = vmatprep.subr.mxu0 0.0
      %691 = vmatpush1.xpose.msra.mxu0 0.0
      %692 = vmatprep.subr.mxu0 0.0
      %693 = vmatpush1.xpose.msra.mxu0 0.0
      %694 = vmatprep.subr.mxu0 0.0
      %695 = vmatpush1.xpose.msra.mxu0 0.0
      %696 = vmatprep.subr.mxu0 0.0
      %697 = vmatpush1.xpose.msra.mxu0 0.0
      %698 = vmatprep.subr.mxu0 0.0
      %699 = vmatpush1.xpose.msra.mxu0 0.0
      %700 = vmatprep.subr.mxu0 0.0
      %701 = vmatpush1.xpose.msra.mxu0 0.0
      %702 = vmatprep.subr.mxu0 0.0
      %703 = vmatpush1.xpose.msra.mxu0 0.0
      %704 = vmatprep.subr.mxu0 0.0
      %705 = vmatpush1.xpose.msra.mxu0 0.0
      %706 = vmatprep.subr.mxu0 0.0
      %707 = vmatpush1.xpose.msra.mxu0 0.0
      %708 = vmatprep.subr.mxu0 0.0
      %709 = vmatpush1.xpose.msra.mxu0 0.0
      %710 = vmatprep.subr.mxu0 0.0
      %711 = vmatpush1.xpose.msra.mxu0 0.0
      %712 = vmatprep.mubr.f32.mxu0 0.0
      %713 = vmatmul.mubr.f32.gmra.mrb[0].mxu0 %v636
      %v714 = vpop.f32.mrb[0].mxu0
      %v715 = vadd.f32 0.0, %v714
      %v716 = vpop.f32.mrb[0].mxu0
      %717 = vmatprep.mubr.f32.mxu0 0.0
      %718 = vmatmul.mubr.f32.gmra.mrb[0].mxu0 %v638
      %v719 = vpop.f32.mrb[0].mxu0
      %v720 = vadd.f32 0.0, %v719
      %v721 = vpop.f32.mrb[0].mxu0
      %722 = vmatprep.mubr.f32.mxu0 0.0
      %723 = vmatmul.mubr.f32.gmra.mrb[0].mxu0 %v640
      %v724 = vpop.f32.mrb[0].mxu0
      %v725 = vadd.f32 0.0, %v724
      %v726 = vpop.f32.mrb[0].mxu0
      %727 = vdwg.mxu0
      %v728 = vmul.f32 %v715, 0.25
      %v729 = vmul.f32 %v720, 0.25
      %v730 = vmul.f32 %v725, 0.25
      %vm731 = vcmask 162816
      %v732 = vsel %vm731, %v728, -inf
      %733 = vmax.xlane.f32.xlu0 %v732
      %v734 = vpop.xlane.xlu0 %733
      %v735 = vsel %vm731, %v729, -inf
      %736 = vmax.xlane.f32.xlu0 %v735
      %v737 = vpop.xlane.xlu0 %736
      %vm738 = vcmask 158720
      %v739 = vsel %vm738, %v730, -inf
      %740 = vmax.xlane.f32.xlu0 %v739
      %v741 = vpop.xlane.xlu0 %740
      %v742 = vsub.f32 %v728, %v734
      %v743 = vsub.f32 %v729, %v737
      %v744 = vsub.f32 %v730, %v741
      %v745 = vmul.f32 %v742, 1.442695
      %v746 = vpow.pop %v745
      %v747 = vmul.f32 %v743, 1.442695
      %v748 = vpow.pop %v747
      %v749 = vmul.f32 %v744, 1.442695
      %v750 = vpow.pop %v749
      %v751 = vsel %vm731, %v746, 0.0
      %752 = vadd.xlane.f32.xlu0 %v751
      %v753 = vpop.xlane.xlu0 %752
      %v754 = vsel %vm731, %v748, 0.0
      %755 = vadd.xlane.f32.xlu0 %v754
      %v756 = vpop.xlane.xlu0 %755
      %v757 = vsel %vm738, %v750, 0.0
      %758 = vadd.xlane.f32.xlu0 %v757
      %v759 = vpop.xlane.xlu0 %758
      %v760 = vrcp.pop %v753
      %v761 = vrcp.pop %v756
      %v762 = vrcp.pop %v759
      %v763 = vmul.f32 %v746, %v760
      %v764 = vmul.f32 %v748, %v761
      %v765 = vmul.f32 %v750, %v762
      %v767 = vsel %vm731, %v763, 0
      %v770 = vsel %vm731, %v764, 0
      %v773 = vsel %vm731, %v765, 0
      %vm775 = vcmask 1043456
      %v777 = vsel %vm775, %v624, 0
      %779 = vmatprep.subr.mxu0 0.0
      %780 = vmatpush1.msra.mxu0 %v612
      %781 = vmatprep.subr.mxu0 0.0
      %782 = vmatpush1.msra.mxu0 %v618
      %783 = vmatprep.subr.mxu0 0.0
      %784 = vmatpush1.msra.mxu0 %v777
      %785 = vmatprep.subr.mxu0 0.0
      %786 = vmatpush1.msra.mxu0 0.0
      %787 = vmatprep.subr.mxu0 0.0
      %788 = vmatpush1.msra.mxu0 0.0
      %789 = vmatprep.subr.mxu0 0.0
      %790 = vmatpush1.msra.mxu0 0.0
      %791 = vmatprep.subr.mxu0 0.0
      %792 = vmatpush1.msra.mxu0 0.0
      %793 = vmatprep.subr.mxu0 0.0
      %794 = vmatpush1.msra.mxu0 0.0
      %795 = vmatprep.subr.mxu0 0.0
      %796 = vmatpush1.msra.mxu0 0.0
      %797 = vmatprep.subr.mxu0 0.0
      %798 = vmatpush1.msra.mxu0 0.0
      %799 = vmatprep.subr.mxu0 0.0
      %800 = vmatpush1.msra.mxu0 0.0
      %801 = vmatprep.subr.mxu0 0.0
      %802 = vmatpush1.msra.mxu0 0.0
      %803 = vmatprep.subr.mxu0 0.0
      %804 = vmatpush1.msra.mxu0 0.0
      %805 = vmatprep.subr.mxu0 0.0
      %806 = vmatpush1.msra.mxu0 0.0
      %807 = vmatprep.subr.mxu0 0.0
      %808 = vmatpush1.msra.mxu0 0.0
      %809 = vmatprep.subr.mxu0 0.0
      %810 = vmatpush1.msra.mxu0 0.0
      %811 = vmatprep.subr.mxu0 0.0
      %812 = vmatpush1.msra.mxu0 0.0
      %813 = vmatprep.subr.mxu0 0.0
      %814 = vmatpush1.msra.mxu0 0.0
      %815 = vmatprep.subr.mxu0 0.0
      %816 = vmatpush1.msra.mxu0 0.0
      %817 = vmatprep.subr.mxu0 0.0
      %818 = vmatpush1.msra.mxu0 0.0
      %819 = vmatprep.subr.mxu0 0.0
      %820 = vmatpush1.msra.mxu0 0.0
      %821 = vmatprep.subr.mxu0 0.0
      %822 = vmatpush1.msra.mxu0 0.0
      %823 = vmatprep.subr.mxu0 0.0
      %824 = vmatpush1.msra.mxu0 0.0
      %825 = vmatprep.subr.mxu0 0.0
      %826 = vmatpush1.msra.mxu0 0.0
      %827 = vmatprep.subr.mxu0 0.0
      %828 = vmatpush1.msra.mxu0 0.0
      %829 = vmatprep.subr.mxu0 0.0
      %830 = vmatpush1.msra.mxu0 0.0
      %831 = vmatprep.subr.mxu0 0.0
      %832 = vmatpush1.msra.mxu0 0.0
      %833 = vmatprep.subr.mxu0 0.0
      %834 = vmatpush1.msra.mxu0 0.0
      %835 = vmatprep.subr.mxu0 0.0
      %836 = vmatpush1.msra.mxu0 0.0
      %837 = vmatprep.subr.mxu0 0.0
      %838 = vmatpush1.msra.mxu0 0.0
      %839 = vmatprep.subr.mxu0 0.0
      %840 = vmatpush1.msra.mxu0 0.0
      %841 = vmatprep.subr.mxu0 0.0
      %842 = vmatpush1.msra.mxu0 0.0
      %843 = vmatprep.mubr.f32.mxu0 0.0
      %844 = vmatmul.mubr.f32.gmra.mrb[0].mxu0 %v767
      %v845 = vpop.f32.mrb[0].mxu0
      %v846 = vadd.f32 0.0, %v845
      %v847 = vpop.f32.mrb[0].mxu0
      %848 = vmatprep.mubr.f32.mxu0 0.0
      %849 = vmatmul.mubr.f32.gmra.mrb[0].mxu0 %v770
      %v850 = vpop.f32.mrb[0].mxu0
      %v851 = vadd.f32 0.0, %v850
      %v852 = vpop.f32.mrb[0].mxu0
      %853 = vmatprep.mubr.f32.mxu0 0.0
      %854 = vmatmul.mubr.f32.gmra.mrb[0].mxu0 %v773
      %v855 = vpop.f32.mrb[0].mxu0
      %v856 = vadd.f32 0.0, %v855
      %v857 = vpop.f32.mrb[0].mxu0
      %858 = vdwg.mxu0
      %859 = vrot.lane.b32.xlu0 %v610, 112
      %v860 = vpop.permute.xlu0 %859
      %861 = vrot.lane.b32.xlu0 %v616, 112
      %v862 = vpop.permute.xlu0 %861
      %863 = vrot.lane.b32.xlu0 %v622, 112
      %v864 = vpop.permute.xlu0 %863
      %865 = vrot.lane.b32.xlu0 %v610, 48
      %v866 = vpop.permute.xlu0 %865
      %867 = vrot.lane.b32.xlu0 %v616, 48
      %v868 = vpop.permute.xlu0 %867
      %869 = vrot.lane.b32.xlu0 %v622, 48
      %v870 = vpop.permute.xlu0 %869
      %v871 = vsel %vm635, %v860, 0
      %v873 = vsel %vm635, %v862, 0
      %v875 = vsel %vm635, %v864, 0
      %v877 = vsel %vm635, %v866, 0
      %v879 = vsel %vm635, %v868, 0
      %v881 = vsel %vm635, %v870, 0
      %883 = vmatprep.subr.mxu0 0.0
      %884 = vmatpush1.xpose.msra.mxu0 %v877
      %885 = vmatprep.subr.mxu0 0.0
      %886 = vmatpush1.xpose.msra.mxu0 %v879
      %887 = vmatprep.subr.mxu0 0.0
      %888 = vmatpush1.xpose.msra.mxu0 %v881
      %889 = vmatprep.subr.mxu0 0.0
      %890 = vmatpush1.xpose.msra.mxu0 0.0
      %891 = vmatprep.subr.mxu0 0.0
      %892 = vmatpush1.xpose.msra.mxu0 0.0
      %893 = vmatprep.subr.mxu0 0.0
      %894 = vmatpush1.xpose.msra.mxu0 0.0
      %895 = vmatprep.subr.mxu0 0.0
      %896 = vmatpush1.xpose.msra.mxu0 0.0
      %897 = vmatprep.subr.mxu0 0.0
      %898 = vmatpush1.xpose.msra.mxu0 0.0
      %899 = vmatprep.subr.mxu0 0.0
      %900 = vmatpush1.xpose.msra.mxu0 0.0
      %901 = vmatprep.subr.mxu0 0.0
      %902 = vmatpush1.xpose.msra.mxu0 0.0
      %903 = vmatprep.subr.mxu0 0.0
      %904 = vmatpush1.xpose.msra.mxu0 0.0
      %905 = vmatprep.subr.mxu0 0.0
      %906 = vmatpush1.xpose.msra.mxu0 0.0
      %907 = vmatprep.subr.mxu0 0.0
      %908 = vmatpush1.xpose.msra.mxu0 0.0
      %909 = vmatprep.subr.mxu0 0.0
      %910 = vmatpush1.xpose.msra.mxu0 0.0
      %911 = vmatprep.subr.mxu0 0.0
      %912 = vmatpush1.xpose.msra.mxu0 0.0
      %913 = vmatprep.subr.mxu0 0.0
      %914 = vmatpush1.xpose.msra.mxu0 0.0
      %915 = vmatprep.subr.mxu0 0.0
      %916 = vmatpush1.xpose.msra.mxu0 0.0
      %917 = vmatprep.subr.mxu0 0.0
      %918 = vmatpush1.xpose.msra.mxu0 0.0
      %919 = vmatprep.subr.mxu0 0.0
      %920 = vmatpush1.xpose.msra.mxu0 0.0
      %921 = vmatprep.subr.mxu0 0.0
      %922 = vmatpush1.xpose.msra.mxu0 0.0
      %923 = vmatprep.subr.mxu0 0.0
      %924 = vmatpush1.xpose.msra.mxu0 0.0
      %925 = vmatprep.subr.mxu0 0.0
      %926 = vmatpush1.xpose.msra.mxu0 0.0
      %927 = vmatprep.subr.mxu0 0.0
      %928 = vmatpush1.xpose.msra.mxu0 0.0
      %929 = vmatprep.subr.mxu0 0.0
      %930 = vmatpush1.xpose.msra.mxu0 0.0
      %931 = vmatprep.subr.mxu0 0.0
      %932 = vmatpush1.xpose.msra.mxu0 0.0
      %933 = vmatprep.subr.mxu0 0.0
      %934 = vmatpush1.xpose.msra.mxu0 0.0
      %935 = vmatprep.subr.mxu0 0.0
      %936 = vmatpush1.xpose.msra.mxu0 0.0
      %937 = vmatprep.subr.mxu0 0.0
      %938 = vmatpush1.xpose.msra.mxu0 0.0
      %939 = vmatprep.subr.mxu0 0.0
      %940 = vmatpush1.xpose.msra.mxu0 0.0
      %941 = vmatprep.subr.mxu0 0.0
      %942 = vmatpush1.xpose.msra.mxu0 0.0
      %943 = vmatprep.subr.mxu0 0.0
      %944 = vmatpush1.xpose.msra.mxu0 0.0
      %945 = vmatprep.subr.mxu0 0.0
      %946 = vmatpush1.xpose.msra.mxu0 0.0
      %947 = vmatprep.mubr.f32.mxu0 0.0
      %948 = vmatmul.mubr.f32.gmra.mrb[0].mxu0 %v871
      %v949 = vpop.f32.mrb[0].mxu0
      %v950 = vadd.f32 0.0, %v949
      %v951 = vpop.f32.mrb[0].mxu0
      %952 = vmatprep.mubr.f32.mxu0 0.0
      %953 = vmatmul.mubr.f32.gmra.mrb[0].mxu0 %v873
      %v954 = vpop.f32.mrb[0].mxu0
      %v955 = vadd.f32 0.0, %v954
      %v956 = vpop.f32.mrb[0].mxu0
      %957 = vmatprep.mubr.f32.mxu0 0.0
      %958 = vmatmul.mubr.f32.gmra.mrb[0].mxu0 %v875
      %v959 = vpop.f32.mrb[0].mxu0
      %v960 = vadd.f32 0.0, %v959
      %v961 = vpop.f32.mrb[0].mxu0
      %962 = vdwg.mxu0
      %v963 = vmul.f32 %v950, 0.25
      %v964 = vmul.f32 %v955, 0.25
      %v965 = vmul.f32 %v960, 0.25
      %v966 = vsel %vm731, %v963, -inf
      %967 = vmax.xlane.f32.xlu0 %v966
      %v968 = vpop.xlane.xlu0 %967
      %v969 = vsel %vm731, %v964, -inf
      %970 = vmax.xlane.f32.xlu0 %v969
      %v971 = vpop.xlane.xlu0 %970
      %v972 = vsel %vm738, %v965, -inf
      %973 = vmax.xlane.f32.xlu0 %v972
      %v974 = vpop.xlane.xlu0 %973
      %v975 = vsub.f32 %v963, %v968
      %v976 = vsub.f32 %v964, %v971
      %v977 = vsub.f32 %v965, %v974
      %v978 = vmul.f32 %v975, 1.442695
      %v979 = vpow.pop %v978
      %v980 = vmul.f32 %v976, 1.442695
      %v981 = vpow.pop %v980
      %v982 = vmul.f32 %v977, 1.442695
      %v983 = vpow.pop %v982
      %v984 = vsel %vm731, %v979, 0.0
      %985 = vadd.xlane.f32.xlu0 %v984
      %v986 = vpop.xlane.xlu0 %985
      %v987 = vsel %vm731, %v981, 0.0
      %988 = vadd.xlane.f32.xlu0 %v987
      %v989 = vpop.xlane.xlu0 %988
      %v990 = vsel %vm738, %v983, 0.0
      %991 = vadd.xlane.f32.xlu0 %v990
      %v992 = vpop.xlane.xlu0 %991
      %v993 = vrcp.pop %v986
      %v994 = vrcp.pop %v989
      %v995 = vrcp.pop %v992
      %v996 = vmul.f32 %v979, %v993
      %v997 = vmul.f32 %v981, %v994
      %v998 = vmul.f32 %v983, %v995
      %1001 = vrot.lane.b32.xlu0 %v612, 112
      %v1002 = vpop.permute.xlu0 %1001
      %1003 = vrot.lane.b32.xlu0 %v618, 112
      %v1004 = vpop.permute.xlu0 %1003
      %1005 = vrot.lane.b32.xlu0 %v624, 112
      %v1006 = vpop.permute.xlu0 %1005
      %v1010 = vsel %vm731, %v996, 0
      %v1013 = vsel %vm731, %v997, 0
      %v1016 = vsel %vm731, %v998, 0
      %v1018 = vsel %vm775, %v1006, 0
      %1020 = vmatprep.subr.mxu0 0.0
      %1021 = vmatpush1.msra.mxu0 %v1002
      %1022 = vmatprep.subr.mxu0 0.0
      %1023 = vmatpush1.msra.mxu0 %v1004
      %1024 = vmatprep.subr.mxu0 0.0
      %1025 = vmatpush1.msra.mxu0 %v1018
      %1026 = vmatprep.subr.mxu0 0.0
      %1027 = vmatpush1.msra.mxu0 0.0
      %1028 = vmatprep.subr.mxu0 0.0
      %1029 = vmatpush1.msra.mxu0 0.0
      %1030 = vmatprep.subr.mxu0 0.0
      %1031 = vmatpush1.msra.mxu0 0.0
      %1032 = vmatprep.subr.mxu0 0.0
      %1033 = vmatpush1.msra.mxu0 0.0
      %1034 = vmatprep.subr.mxu0 0.0
      %1035 = vmatpush1.msra.mxu0 0.0
      %1036 = vmatprep.subr.mxu0 0.0
      %1037 = vmatpush1.msra.mxu0 0.0
      %1038 = vmatprep.subr.mxu0 0.0
      %1039 = vmatpush1.msra.mxu0 0.0
      %1040 = vmatprep.subr.mxu0 0.0
      %1041 = vmatpush1.msra.mxu0 0.0
      %1042 = vmatprep.subr.mxu0 0.0
      %1043 = vmatpush1.msra.mxu0 0.0
      %1044 = vmatprep.subr.mxu0 0.0
      %1045 = vmatpush1.msra.mxu0 0.0
      %1046 = vmatprep.subr.mxu0 0.0
      %1047 = vmatpush1.msra.mxu0 0.0
      %1048 = vmatprep.subr.mxu0 0.0
      %1049 = vmatpush1.msra.mxu0 0.0
      %1050 = vmatprep.subr.mxu0 0.0
      %1051 = vmatpush1.msra.mxu0 0.0
      %1052 = vmatprep.subr.mxu0 0.0
      %1053 = vmatpush1.msra.mxu0 0.0
      %1054 = vmatprep.subr.mxu0 0.0
      %1055 = vmatpush1.msra.mxu0 0.0
      %1056 = vmatprep.subr.mxu0 0.0
      %1057 = vmatpush1.msra.mxu0 0.0
      %1058 = vmatprep.subr.mxu0 0.0
      %1059 = vmatpush1.msra.mxu0 0.0
      %1060 = vmatprep.subr.mxu0 0.0
      %1061 = vmatpush1.msra.mxu0 0.0
      %1062 = vmatprep.subr.mxu0 0.0
      %1063 = vmatpush1.msra.mxu0 0.0
      %1064 = vmatprep.subr.mxu0 0.0
      %1065 = vmatpush1.msra.mxu0 0.0
      %1066 = vmatprep.subr.mxu0 0.0
      %1067 = vmatpush1.msra.mxu0 0.0
      %1068 = vmatprep.subr.mxu0 0.0
      %1069 = vmatpush1.msra.mxu0 0.0
      %1070 = vmatprep.subr.mxu0 0.0
      %1071 = vmatpush1.msra.mxu0 0.0
      %1072 = vmatprep.subr.mxu0 0.0
      %1073 = vmatpush1.msra.mxu0 0.0
      %1074 = vmatprep.subr.mxu0 0.0
      %1075 = vmatpush1.msra.mxu0 0.0
      %1076 = vmatprep.subr.mxu0 0.0
      %1077 = vmatpush1.msra.mxu0 0.0
      %1078 = vmatprep.subr.mxu0 0.0
      %1079 = vmatpush1.msra.mxu0 0.0
      %1080 = vmatprep.subr.mxu0 0.0
      %1081 = vmatpush1.msra.mxu0 0.0
      %1082 = vmatprep.subr.mxu0 0.0
      %1083 = vmatpush1.msra.mxu0 0.0
      %1084 = vmatprep.mubr.f32.mxu0 0.0
      %1085 = vmatmul.mubr.f32.gmra.mrb[0].mxu0 %v1010
      %v1086 = vpop.f32.mrb[0].mxu0
      %v1087 = vadd.f32 0.0, %v1086
      %v1088 = vpop.f32.mrb[0].mxu0
      %1089 = vmatprep.mubr.f32.mxu0 0.0
      %1090 = vmatmul.mubr.f32.gmra.mrb[0].mxu0 %v1013
      %v1091 = vpop.f32.mrb[0].mxu0
      %v1092 = vadd.f32 0.0, %v1091
      %v1093 = vpop.f32.mrb[0].mxu0
      %1094 = vmatprep.mubr.f32.mxu0 0.0
      %1095 = vmatmul.mubr.f32.gmra.mrb[0].mxu0 %v1016
      %v1096 = vpop.f32.mrb[0].mxu0
      %v1097 = vadd.f32 0.0, %v1096
      %v1098 = vpop.f32.mrb[0].mxu0
      %1099 = vdwg.mxu0
      %1100 = vrot.lane.b32.xlu0 %v610, 96
      %v1101 = vpop.permute.xlu0 %1100
      %1102 = vrot.lane.b32.xlu0 %v616, 96
      %v1103 = vpop.permute.xlu0 %1102
      %1104 = vrot.lane.b32.xlu0 %v622, 96
      %v1105 = vpop.permute.xlu0 %1104
      %1106 = vrot.lane.b32.xlu0 %v610, 32
      %v1107 = vpop.permute.xlu0 %1106
      %1108 = vrot.lane.b32.xlu0 %v616, 32
      %v1109 = vpop.permute.xlu0 %1108
      %1110 = vrot.lane.b32.xlu0 %v622, 32
      %v1111 = vpop.permute.xlu0 %1110
      %v1112 = vsel %vm635, %v1101, 0
      %v1114 = vsel %vm635, %v1103, 0
      %v1116 = vsel %vm635, %v1105, 0
      %v1118 = vsel %vm635, %v1107, 0
      %v1120 = vsel %vm635, %v1109, 0
      %v1122 = vsel %vm635, %v1111, 0
      %1124 = vmatprep.subr.mxu0 0.0
      %1125 = vmatpush1.xpose.msra.mxu0 %v1118
      %1126 = vmatprep.subr.mxu0 0.0
      %1127 = vmatpush1.xpose.msra.mxu0 %v1120
      %1128 = vmatprep.subr.mxu0 0.0
      %1129 = vmatpush1.xpose.msra.mxu0 %v1122
      %1130 = vmatprep.subr.mxu0 0.0
      %1131 = vmatpush1.xpose.msra.mxu0 0.0
      %1132 = vmatprep.subr.mxu0 0.0
      %1133 = vmatpush1.xpose.msra.mxu0 0.0
      %1134 = vmatprep.subr.mxu0 0.0
      %1135 = vmatpush1.xpose.msra.mxu0 0.0
      %1136 = vmatprep.subr.mxu0 0.0
      %1137 = vmatpush1.xpose.msra.mxu0 0.0
      %1138 = vmatprep.subr.mxu0 0.0
      %1139 = vmatpush1.xpose.msra.mxu0 0.0
      %1140 = vmatprep.subr.mxu0 0.0
      %1141 = vmatpush1.xpose.msra.mxu0 0.0
      %1142 = vmatprep.subr.mxu0 0.0
      %1143 = vmatpush1.xpose.msra.mxu0 0.0
      %1144 = vmatprep.subr.mxu0 0.0
      %1145 = vmatpush1.xpose.msra.mxu0 0.0
      %1146 = vmatprep.subr.mxu0 0.0
      %1147 = vmatpush1.xpose.msra.mxu0 0.0
      %1148 = vmatprep.subr.mxu0 0.0
      %1149 = vmatpush1.xpose.msra.mxu0 0.0
      %1150 = vmatprep.subr.mxu0 0.0
      %1151 = vmatpush1.xpose.msra.mxu0 0.0
      %1152 = vmatprep.subr.mxu0 0.0
      %1153 = vmatpush1.xpose.msra.mxu0 0.0
      %1154 = vmatprep.subr.mxu0 0.0
      %1155 = vmatpush1.xpose.msra.mxu0 0.0
      %1156 = vmatprep.subr.mxu0 0.0
      %1157 = vmatpush1.xpose.msra.mxu0 0.0
      %1158 = vmatprep.subr.mxu0 0.0
      %1159 = vmatpush1.xpose.msra.mxu0 0.0
      %1160 = vmatprep.subr.mxu0 0.0
      %1161 = vmatpush1.xpose.msra.mxu0 0.0
      %1162 = vmatprep.subr.mxu0 0.0
      %1163 = vmatpush1.xpose.msra.mxu0 0.0
      %1164 = vmatprep.subr.mxu0 0.0
      %1165 = vmatpush1.xpose.msra.mxu0 0.0
      %1166 = vmatprep.subr.mxu0 0.0
      %1167 = vmatpush1.xpose.msra.mxu0 0.0
      %1168 = vmatprep.subr.mxu0 0.0
      %1169 = vmatpush1.xpose.msra.mxu0 0.0
      %1170 = vmatprep.subr.mxu0 0.0
      %1171 = vmatpush1.xpose.msra.mxu0 0.0
      %1172 = vmatprep.subr.mxu0 0.0
      %1173 = vmatpush1.xpose.msra.mxu0 0.0
      %1174 = vmatprep.subr.mxu0 0.0
      %1175 = vmatpush1.xpose.msra.mxu0 0.0
      %1176 = vmatprep.subr.mxu0 0.0
      %1177 = vmatpush1.xpose.msra.mxu0 0.0
      %1178 = vmatprep.subr.mxu0 0.0
      %1179 = vmatpush1.xpose.msra.mxu0 0.0
      %1180 = vmatprep.subr.mxu0 0.0
      %1181 = vmatpush1.xpose.msra.mxu0 0.0
      %1182 = vmatprep.subr.mxu0 0.0
      %1183 = vmatpush1.xpose.msra.mxu0 0.0
      %1184 = vmatprep.subr.mxu0 0.0
      %1185 = vmatpush1.xpose.msra.mxu0 0.0
      %1186 = vmatprep.subr.mxu0 0.0
      %1187 = vmatpush1.xpose.msra.mxu0 0.0
      %1188 = vmatprep.mubr.f32.mxu0 0.0
      %1189 = vmatmul.mubr.f32.gmra.mrb[0].mxu0 %v1112
      %v1190 = vpop.f32.mrb[0].mxu0
      %v1191 = vadd.f32 0.0, %v1190
      %v1192 = vpop.f32.mrb[0].mxu0
      %1193 = vmatprep.mubr.f32.mxu0 0.0
      %1194 = vmatmul.mubr.f32.gmra.mrb[0].mxu0 %v1114
      %v1195 = vpop.f32.mrb[0].mxu0
      %v1196 = vadd.f32 0.0, %v1195
      %v1197 = vpop.f32.mrb[0].mxu0
      %1198 = vmatprep.mubr.f32.mxu0 0.0
      %1199 = vmatmul.mubr.f32.gmra.mrb[0].mxu0 %v1116
      %v1200 = vpop.f32.mrb[0].mxu0
      %v1201 = vadd.f32 0.0, %v1200
      %v1202 = vpop.f32.mrb[0].mxu0
      %1203 = vdwg.mxu0
      %v1204 = vmul.f32 %v1191, 0.25
      %v1205 = vmul.f32 %v1196, 0.25
      %v1206 = vmul.f32 %v1201, 0.25
      %v1207 = vsel %vm731, %v1204, -inf
      %1208 = vmax.xlane.f32.xlu0 %v1207
      %v1209 = vpop.xlane.xlu0 %1208
      %v1210 = vsel %vm731, %v1205, -inf
      %1211 = vmax.xlane.f32.xlu0 %v1210
      %v1212 = vpop.xlane.xlu0 %1211
      %v1213 = vsel %vm738, %v1206, -inf
      %1214 = vmax.xlane.f32.xlu0 %v1213
      %v1215 = vpop.xlane.xlu0 %1214
      %v1216 = vsub.f32 %v1204, %v1209
      %v1217 = vsub.f32 %v1205, %v1212
      %v1218 = vsub.f32 %v1206, %v1215
      %v1219 = vmul.f32 %v1216, 1.442695
      %v1220 = vpow.pop %v1219
      %v1221 = vmul.f32 %v1217, 1.442695
      %v1222 = vpow.pop %v1221
      %v1223 = vmul.f32 %v1218, 1.442695
      %v1224 = vpow.pop %v1223
      %v1225 = vsel %vm731, %v1220, 0.0
      %1226 = vadd.xlane.f32.xlu0 %v1225
      %v1227 = vpop.xlane.xlu0 %1226
      %v1228 = vsel %vm731, %v1222, 0.0
      %1229 = vadd.xlane.f32.xlu0 %v1228
      %v1230 = vpop.xlane.xlu0 %1229
      %v1231 = vsel %vm738, %v1224, 0.0
      %1232 = vadd.xlane.f32.xlu0 %v1231
      %v1233 = vpop.xlane.xlu0 %1232
      %v1234 = vrcp.pop %v1227
      %v1235 = vrcp.pop %v1230
      %v1236 = vrcp.pop %v1233
      %v1237 = vmul.f32 %v1220, %v1234
      %v1238 = vmul.f32 %v1222, %v1235
      %v1239 = vmul.f32 %v1224, %v1236
      %1240 = vrot.lane.b32.xlu0 %v612, 96
      %v1241 = vpop.permute.xlu0 %1240
      %1242 = vrot.lane.b32.xlu0 %v618, 96
      %v1243 = vpop.permute.xlu0 %1242
      %1244 = vrot.lane.b32.xlu0 %v624, 96
      %v1245 = vpop.permute.xlu0 %1244
      %v1249 = vsel %vm731, %v1237, 0
      %v1252 = vsel %vm731, %v1238, 0
      %v1255 = vsel %vm731, %v1239, 0
      %v1257 = vsel %vm775, %v1245, 0
      %1259 = vmatprep.subr.mxu0 0.0
      %1260 = vmatpush1.msra.mxu0 %v1241
      %1261 = vmatprep.subr.mxu0 0.0
      %1262 = vmatpush1.msra.mxu0 %v1243
      %1263 = vmatprep.subr.mxu0 0.0
      %1264 = vmatpush1.msra.mxu0 %v1257
      %1265 = vmatprep.subr.mxu0 0.0
      %1266 = vmatpush1.msra.mxu0 0.0
      %1267 = vmatprep.subr.mxu0 0.0
      %1268 = vmatpush1.msra.mxu0 0.0
      %1269 = vmatprep.subr.mxu0 0.0
      %1270 = vmatpush1.msra.mxu0 0.0
      %1271 = vmatprep.subr.mxu0 0.0
      %1272 = vmatpush1.msra.mxu0 0.0
      %1273 = vmatprep.subr.mxu0 0.0
      %1274 = vmatpush1.msra.mxu0 0.0
      %1275 = vmatprep.subr.mxu0 0.0
      %1276 = vmatpush1.msra.mxu0 0.0
      %1277 = vmatprep.subr.mxu0 0.0
      %1278 = vmatpush1.msra.mxu0 0.0
      %1279 = vmatprep.subr.mxu0 0.0
      %1280 = vmatpush1.msra.mxu0 0.0
      %1281 = vmatprep.subr.mxu0 0.0
      %1282 = vmatpush1.msra.mxu0 0.0
      %1283 = vmatprep.subr.mxu0 0.0
      %1284 = vmatpush1.msra.mxu0 0.0
      %1285 = vmatprep.subr.mxu0 0.0
      %1286 = vmatpush1.msra.mxu0 0.0
      %1287 = vmatprep.subr.mxu0 0.0
      %1288 = vmatpush1.msra.mxu0 0.0
      %1289 = vmatprep.subr.mxu0 0.0
      %1290 = vmatpush1.msra.mxu0 0.0
      %1291 = vmatprep.subr.mxu0 0.0
      %1292 = vmatpush1.msra.mxu0 0.0
      %1293 = vmatprep.subr.mxu0 0.0
      %1294 = vmatpush1.msra.mxu0 0.0
      %1295 = vmatprep.subr.mxu0 0.0
      %1296 = vmatpush1.msra.mxu0 0.0
      %1297 = vmatprep.subr.mxu0 0.0
      %1298 = vmatpush1.msra.mxu0 0.0
      %1299 = vmatprep.subr.mxu0 0.0
      %1300 = vmatpush1.msra.mxu0 0.0
      %1301 = vmatprep.subr.mxu0 0.0
      %1302 = vmatpush1.msra.mxu0 0.0
      %1303 = vmatprep.subr.mxu0 0.0
      %1304 = vmatpush1.msra.mxu0 0.0
      %1305 = vmatprep.subr.mxu0 0.0
      %1306 = vmatpush1.msra.mxu0 0.0
      %1307 = vmatprep.subr.mxu0 0.0
      %1308 = vmatpush1.msra.mxu0 0.0
      %1309 = vmatprep.subr.mxu0 0.0
      %1310 = vmatpush1.msra.mxu0 0.0
      %1311 = vmatprep.subr.mxu0 0.0
      %1312 = vmatpush1.msra.mxu0 0.0
      %1313 = vmatprep.subr.mxu0 0.0
      %1314 = vmatpush1.msra.mxu0 0.0
      %1315 = vmatprep.subr.mxu0 0.0
      %1316 = vmatpush1.msra.mxu0 0.0
      %1317 = vmatprep.subr.mxu0 0.0
      %1318 = vmatpush1.msra.mxu0 0.0
      %1319 = vmatprep.subr.mxu0 0.0
      %1320 = vmatpush1.msra.mxu0 0.0
      %1321 = vmatprep.subr.mxu0 0.0
      %1322 = vmatpush1.msra.mxu0 0.0
      %1323 = vmatprep.mubr.f32.mxu0 0.0
      %1324 = vmatmul.mubr.f32.gmra.mrb[0].mxu0 %v1249
      %v1325 = vpop.f32.mrb[0].mxu0
      %v1326 = vadd.f32 0.0, %v1325
      %v1327 = vpop.f32.mrb[0].mxu0
      %1328 = vmatprep.mubr.f32.mxu0 0.0
      %1329 = vmatmul.mubr.f32.gmra.mrb[0].mxu0 %v1252
      %v1330 = vpop.f32.mrb[0].mxu0
      %v1331 = vadd.f32 0.0, %v1330
      %v1332 = vpop.f32.mrb[0].mxu0
      %1333 = vmatprep.mubr.f32.mxu0 0.0
      %1334 = vmatmul.mubr.f32.gmra.mrb[0].mxu0 %v1255
      %v1335 = vpop.f32.mrb[0].mxu0
      %v1336 = vadd.f32 0.0, %v1335
      %v1337 = vpop.f32.mrb[0].mxu0
      %1338 = vdwg.mxu0
      %1339 = vrot.lane.b32.xlu0 %v610, 80
      %v1340 = vpop.permute.xlu0 %1339
      %1341 = vrot.lane.b32.xlu0 %v616, 80
      %v1342 = vpop.permute.xlu0 %1341
      %1343 = vrot.lane.b32.xlu0 %v622, 80
      %v1344 = vpop.permute.xlu0 %1343
      %1345 = vrot.lane.b32.xlu0 %v610, 16
      %v1346 = vpop.permute.xlu0 %1345
      %1347 = vrot.lane.b32.xlu0 %v616, 16
      %v1348 = vpop.permute.xlu0 %1347
      %1349 = vrot.lane.b32.xlu0 %v622, 16
      %v1350 = vpop.permute.xlu0 %1349
      %v1351 = vsel %vm635, %v1340, 0
      %v1353 = vsel %vm635, %v1342, 0
      %v1355 = vsel %vm635, %v1344, 0
      %v1357 = vsel %vm635, %v1346, 0
      %v1359 = vsel %vm635, %v1348, 0
      %v1361 = vsel %vm635, %v1350, 0
      %1363 = vmatprep.subr.mxu0 0.0
      %1364 = vmatpush1.xpose.msra.mxu0 %v1357
      %1365 = vmatprep.subr.mxu0 0.0
      %1366 = vmatpush1.xpose.msra.mxu0 %v1359
      %1367 = vmatprep.subr.mxu0 0.0
      %1368 = vmatpush1.xpose.msra.mxu0 %v1361
      %1369 = vmatprep.subr.mxu0 0.0
      %1370 = vmatpush1.xpose.msra.mxu0 0.0
      %1371 = vmatprep.subr.mxu0 0.0
      %1372 = vmatpush1.xpose.msra.mxu0 0.0
      %1373 = vmatprep.subr.mxu0 0.0
      %1374 = vmatpush1.xpose.msra.mxu0 0.0
      %1375 = vmatprep.subr.mxu0 0.0
      %1376 = vmatpush1.xpose.msra.mxu0 0.0
      %1377 = vmatprep.subr.mxu0 0.0
      %1378 = vmatpush1.xpose.msra.mxu0 0.0
      %1379 = vmatprep.subr.mxu0 0.0
      %1380 = vmatpush1.xpose.msra.mxu0 0.0
      %1381 = vmatprep.subr.mxu0 0.0
      %1382 = vmatpush1.xpose.msra.mxu0 0.0
      %1383 = vmatprep.subr.mxu0 0.0
      %1384 = vmatpush1.xpose.msra.mxu0 0.0
      %1385 = vmatprep.subr.mxu0 0.0
      %1386 = vmatpush1.xpose.msra.mxu0 0.0
      %1387 = vmatprep.subr.mxu0 0.0
      %1388 = vmatpush1.xpose.msra.mxu0 0.0
      %1389 = vmatprep.subr.mxu0 0.0
      %1390 = vmatpush1.xpose.msra.mxu0 0.0
      %1391 = vmatprep.subr.mxu0 0.0
      %1392 = vmatpush1.xpose.msra.mxu0 0.0
      %1393 = vmatprep.subr.mxu0 0.0
      %1394 = vmatpush1.xpose.msra.mxu0 0.0
      %1395 = vmatprep.subr.mxu0 0.0
      %1396 = vmatpush1.xpose.msra.mxu0 0.0
      %1397 = vmatprep.subr.mxu0 0.0
      %1398 = vmatpush1.xpose.msra.mxu0 0.0
      %1399 = vmatprep.subr.mxu0 0.0
      %1400 = vmatpush1.xpose.msra.mxu0 0.0
      %1401 = vmatprep.subr.mxu0 0.0
      %1402 = vmatpush1.xpose.msra.mxu0 0.0
      %1403 = vmatprep.subr.mxu0 0.0
      %1404 = vmatpush1.xpose.msra.mxu0 0.0
      %1405 = vmatprep.subr.mxu0 0.0
      %1406 = vmatpush1.xpose.msra.mxu0 0.0
      %1407 = vmatprep.subr.mxu0 0.0
      %1408 = vmatpush1.xpose.msra.mxu0 0.0
      %1409 = vmatprep.subr.mxu0 0.0
      %1410 = vmatpush1.xpose.msra.mxu0 0.0
      %1411 = vmatprep.subr.mxu0 0.0
      %1412 = vmatpush1.xpose.msra.mxu0 0.0
      %1413 = vmatprep.subr.mxu0 0.0
      %1414 = vmatpush1.xpose.msra.mxu0 0.0
      %1415 = vmatprep.subr.mxu0 0.0
      %1416 = vmatpush1.xpose.msra.mxu0 0.0
      %1417 = vmatprep.subr.mxu0 0.0
      %1418 = vmatpush1.xpose.msra.mxu0 0.0
      %1419 = vmatprep.subr.mxu0 0.0
      %1420 = vmatpush1.xpose.msra.mxu0 0.0
      %1421 = vmatprep.subr.mxu0 0.0
      %1422 = vmatpush1.xpose.msra.mxu0 0.0
      %1423 = vmatprep.subr.mxu0 0.0
      %1424 = vmatpush1.xpose.msra.mxu0 0.0
      %1425 = vmatprep.subr.mxu0 0.0
      %1426 = vmatpush1.xpose.msra.mxu0 0.0
      %1427 = vmatprep.mubr.f32.mxu0 0.0
      %1428 = vmatmul.mubr.f32.gmra.mrb[0].mxu0 %v1351
      %v1429 = vpop.f32.mrb[0].mxu0
      %v1430 = vadd.f32 0.0, %v1429
      %v1431 = vpop.f32.mrb[0].mxu0
      %1432 = vmatprep.mubr.f32.mxu0 0.0
      %1433 = vmatmul.mubr.f32.gmra.mrb[0].mxu0 %v1353
      %v1434 = vpop.f32.mrb[0].mxu0
      %v1435 = vadd.f32 0.0, %v1434
      %v1436 = vpop.f32.mrb[0].mxu0
      %1437 = vmatprep.mubr.f32.mxu0 0.0
      %1438 = vmatmul.mubr.f32.gmra.mrb[0].mxu0 %v1355
      %v1439 = vpop.f32.mrb[0].mxu0
      %v1440 = vadd.f32 0.0, %v1439
      %v1441 = vpop.f32.mrb[0].mxu0
      %1442 = vdwg.mxu0
      %v1443 = vmul.f32 %v1430, 0.25
      %v1444 = vmul.f32 %v1435, 0.25
      %v1445 = vmul.f32 %v1440, 0.25
      %v1446 = vsel %vm731, %v1443, -inf
      %1447 = vmax.xlane.f32.xlu0 %v1446
      %v1448 = vpop.xlane.xlu0 %1447
      %v1449 = vsel %vm731, %v1444, -inf
      %1450 = vmax.xlane.f32.xlu0 %v1449
      %v1451 = vpop.xlane.xlu0 %1450
      %v1452 = vsel %vm738, %v1445, -inf
      %1453 = vmax.xlane.f32.xlu0 %v1452
      %v1454 = vpop.xlane.xlu0 %1453
      %v1455 = vsub.f32 %v1443, %v1448
      %v1456 = vsub.f32 %v1444, %v1451
      %v1457 = vsub.f32 %v1445, %v1454
      %v1458 = vmul.f32 %v1455, 1.442695
      %v1459 = vpow.pop %v1458
      %v1460 = vmul.f32 %v1456, 1.442695
      %v1461 = vpow.pop %v1460
      %v1462 = vmul.f32 %v1457, 1.442695
      %v1463 = vpow.pop %v1462
      %v1464 = vsel %vm731, %v1459, 0.0
      %1465 = vadd.xlane.f32.xlu0 %v1464
      %v1466 = vpop.xlane.xlu0 %1465
      %v1467 = vsel %vm731, %v1461, 0.0
      %1468 = vadd.xlane.f32.xlu0 %v1467
      %v1469 = vpop.xlane.xlu0 %1468
      %v1470 = vsel %vm738, %v1463, 0.0
      %1471 = vadd.xlane.f32.xlu0 %v1470
      %v1472 = vpop.xlane.xlu0 %1471
      %v1473 = vrcp.pop %v1466
      %v1474 = vrcp.pop %v1469
      %v1475 = vrcp.pop %v1472
      %v1476 = vmul.f32 %v1459, %v1473
      %v1477 = vmul.f32 %v1461, %v1474
      %v1478 = vmul.f32 %v1463, %v1475
      %1479 = vrot.lane.b32.xlu0 %v612, 80
      %v1480 = vpop.permute.xlu0 %1479
      %1481 = vrot.lane.b32.xlu0 %v618, 80
      %v1482 = vpop.permute.xlu0 %1481
      %1483 = vrot.lane.b32.xlu0 %v624, 80
      %v1484 = vpop.permute.xlu0 %1483
      %v1488 = vsel %vm731, %v1476, 0
      %v1491 = vsel %vm731, %v1477, 0
      %v1494 = vsel %vm731, %v1478, 0
      %v1496 = vsel %vm775, %v1484, 0
      %1498 = vmatprep.subr.mxu0 0.0
      %1499 = vmatpush1.msra.mxu0 %v1480
      %1500 = vmatprep.subr.mxu0 0.0
      %1501 = vmatpush1.msra.mxu0 %v1482
      %1502 = vmatprep.subr.mxu0 0.0
      %1503 = vmatpush1.msra.mxu0 %v1496
      %1504 = vmatprep.subr.mxu0 0.0
      %1505 = vmatpush1.msra.mxu0 0.0
      %1506 = vmatprep.subr.mxu0 0.0
      %1507 = vmatpush1.msra.mxu0 0.0
      %1508 = vmatprep.subr.mxu0 0.0
      %1509 = vmatpush1.msra.mxu0 0.0
      %1510 = vmatprep.subr.mxu0 0.0
      %1511 = vmatpush1.msra.mxu0 0.0
      %1512 = vmatprep.subr.mxu0 0.0
      %1513 = vmatpush1.msra.mxu0 0.0
      %1514 = vmatprep.subr.mxu0 0.0
      %1515 = vmatpush1.msra.mxu0 0.0
      %1516 = vmatprep.subr.mxu0 0.0
      %1517 = vmatpush1.msra.mxu0 0.0
      %1518 = vmatprep.subr.mxu0 0.0
      %1519 = vmatpush1.msra.mxu0 0.0
      %1520 = vmatprep.subr.mxu0 0.0
      %1521 = vmatpush1.msra.mxu0 0.0
      %1522 = vmatprep.subr.mxu0 0.0
      %1523 = vmatpush1.msra.mxu0 0.0
      %1524 = vmatprep.subr.mxu0 0.0
      %1525 = vmatpush1.msra.mxu0 0.0
      %1526 = vmatprep.subr.mxu0 0.0
      %1527 = vmatpush1.msra.mxu0 0.0
      %1528 = vmatprep.subr.mxu0 0.0
      %1529 = vmatpush1.msra.mxu0 0.0
      %1530 = vmatprep.subr.mxu0 0.0
      %1531 = vmatpush1.msra.mxu0 0.0
      %1532 = vmatprep.subr.mxu0 0.0
      %1533 = vmatpush1.msra.mxu0 0.0
      %1534 = vmatprep.subr.mxu0 0.0
      %1535 = vmatpush1.msra.mxu0 0.0
      %1536 = vmatprep.subr.mxu0 0.0
      %1537 = vmatpush1.msra.mxu0 0.0
      %1538 = vmatprep.subr.mxu0 0.0
      %1539 = vmatpush1.msra.mxu0 0.0
      %1540 = vmatprep.subr.mxu0 0.0
      %1541 = vmatpush1.msra.mxu0 0.0
      %1542 = vmatprep.subr.mxu0 0.0
      %1543 = vmatpush1.msra.mxu0 0.0
      %1544 = vmatprep.subr.mxu0 0.0
      %1545 = vmatpush1.msra.mxu0 0.0
      %1546 = vmatprep.subr.mxu0 0.0
      %1547 = vmatpush1.msra.mxu0 0.0
      %1548 = vmatprep.subr.mxu0 0.0
      %1549 = vmatpush1.msra.mxu0 0.0
      %1550 = vmatprep.subr.mxu0 0.0
      %1551 = vmatpush1.msra.mxu0 0.0
      %1552 = vmatprep.subr.mxu0 0.0
      %1553 = vmatpush1.msra.mxu0 0.0
      %1554 = vmatprep.subr.mxu0 0.0
      %1555 = vmatpush1.msra.mxu0 0.0
      %1556 = vmatprep.subr.mxu0 0.0
      %1557 = vmatpush1.msra.mxu0 0.0
      %1558 = vmatprep.subr.mxu0 0.0
      %1559 = vmatpush1.msra.mxu0 0.0
      %1560 = vmatprep.subr.mxu0 0.0
      %1561 = vmatpush1.msra.mxu0 0.0
      %1562 = vmatprep.mubr.f32.mxu0 0.0
      %1563 = vmatmul.mubr.f32.gmra.mrb[0].mxu0 %v1488
      %v1564 = vpop.f32.mrb[0].mxu0
      %v1565 = vadd.f32 0.0, %v1564
      %v1566 = vpop.f32.mrb[0].mxu0
      %1567 = vmatprep.mubr.f32.mxu0 0.0
      %1568 = vmatmul.mubr.f32.gmra.mrb[0].mxu0 %v1491
      %v1569 = vpop.f32.mrb[0].mxu0
      %v1570 = vadd.f32 0.0, %v1569
      %v1571 = vpop.f32.mrb[0].mxu0
      %1572 = vmatprep.mubr.f32.mxu0 0.0
      %1573 = vmatmul.mubr.f32.gmra.mrb[0].mxu0 %v1494
      %v1574 = vpop.f32.mrb[0].mxu0
      %v1575 = vadd.f32 0.0, %v1574
      %v1576 = vpop.f32.mrb[0].mxu0
      %1577 = vdwg.mxu0
      %1581 = vrot.lane.b32.xlu0 %v1087, 16
      %v1582 = vpop.permute.xlu0 %1581
      %1583 = vrot.lane.b32.xlu0 %v1092, 16
      %v1584 = vpop.permute.xlu0 %1583
      %1585 = vrot.lane.b32.xlu0 %v1097, 16
      %v1586 = vpop.permute.xlu0 %1585
      %1593 = vrot.lane.b32.xlu0 %v1326, 32
      %v1594 = vpop.permute.xlu0 %1593
      %1595 = vrot.lane.b32.xlu0 %v1331, 32
      %v1596 = vpop.permute.xlu0 %1595
      %1597 = vrot.lane.b32.xlu0 %v1336, 32
      %v1598 = vpop.permute.xlu0 %1597
      %1605 = vrot.lane.b32.xlu0 %v1565, 48
      %v1606 = vpop.permute.xlu0 %1605
      %1607 = vrot.lane.b32.xlu0 %v1570, 48
      %v1608 = vpop.permute.xlu0 %1607
      %1609 = vrot.lane.b32.xlu0 %v1575, 48
      %v1610 = vpop.permute.xlu0 %1609
      %v1614 = vsel %vm635, %v846, %v1582
      %v1615 = vsel %vm635, %v851, %v1584
      %v1616 = vsel %vm635, %v856, %v1586
      %vm1617 = vcmask 261120
      %v1618 = vsel %vm1617, %v1614, %v1594
      %v1619 = vsel %vm1617, %v1615, %v1596
      %v1620 = vsel %vm1617, %v1616, %v1598
      %vm1621 = vcmask 392192
      %v1622 = vsel %vm1621, %v1618, %v1606
      %v1623 = vsel %vm1621, %v1619, %v1608
      %v1624 = vsel %vm1621, %v1620, %v1610
      %v1625 = vld [vmem:[%s5] sm:$0xff]
      %v1626 = vld [vmem:[%s5 + $0x8] sm:$0xff]
      %v1627 = vld [vmem:[%s5 + $0x10] sm:$0xff]
      %v1628 = vld [vmem:[%s5 + $0x18] sm:$0xff]
      %v1629 = vld [vmem:[%s5 + $0x20] sm:$0xff]
      %v1630 = vld [vmem:[%s5 + $0x28] sm:$0xff]
      %v1631 = vld [vmem:[%s5 + $0x30] sm:$0xff]
      %v1632 = vld [vmem:[%s5 + $0x38] sm:$0xff]
      %v1634 = vsel %vm446, %v1622, 0
      %v1637 = vsel %vm446, %v1623, 0
      %v1640 = vsel %vm446, %v1624, 0
      %1642 = vmatprep.subr.mxu0 0.0
      %1643 = vmatpush1.msra.mxu0 %v1625
      %1644 = vmatprep.subr.mxu0 0.0
      %1645 = vmatpush1.msra.mxu0 %v1626
      %1646 = vmatprep.subr.mxu0 0.0
      %1647 = vmatpush1.msra.mxu0 %v1627
      %1648 = vmatprep.subr.mxu0 0.0
      %1649 = vmatpush1.msra.mxu0 %v1628
      %1650 = vmatprep.subr.mxu0 0.0
      %1651 = vmatpush1.msra.mxu0 %v1629
      %1652 = vmatprep.subr.mxu0 0.0
      %1653 = vmatpush1.msra.mxu0 %v1630
      %1654 = vmatprep.subr.mxu0 0.0
      %1655 = vmatpush1.msra.mxu0 %v1631
      %1656 = vmatprep.subr.mxu0 0.0
      %1657 = vmatpush1.msra.mxu0 %v1632
      %1658 = vmatprep.subr.mxu0 0.0
      %1659 = vmatpush1.msra.mxu0 0.0
      %1660 = vmatprep.subr.mxu0 0.0
      %1661 = vmatpush1.msra.mxu0 0.0
      %1662 = vmatprep.subr.mxu0 0.0
      %1663 = vmatpush1.msra.mxu0 0.0
      %1664 = vmatprep.subr.mxu0 0.0
      %1665 = vmatpush1.msra.mxu0 0.0
      %1666 = vmatprep.subr.mxu0 0.0
      %1667 = vmatpush1.msra.mxu0 0.0
      %1668 = vmatprep.subr.mxu0 0.0
      %1669 = vmatpush1.msra.mxu0 0.0
      %1670 = vmatprep.subr.mxu0 0.0
      %1671 = vmatpush1.msra.mxu0 0.0
      %1672 = vmatprep.subr.mxu0 0.0
      %1673 = vmatpush1.msra.mxu0 0.0
      %1674 = vmatprep.subr.mxu0 0.0
      %1675 = vmatpush1.msra.mxu0 0.0
      %1676 = vmatprep.subr.mxu0 0.0
      %1677 = vmatpush1.msra.mxu0 0.0
      %1678 = vmatprep.subr.mxu0 0.0
      %1679 = vmatpush1.msra.mxu0 0.0
      %1680 = vmatprep.subr.mxu0 0.0
      %1681 = vmatpush1.msra.mxu0 0.0
      %1682 = vmatprep.subr.mxu0 0.0
      %1683 = vmatpush1.msra.mxu0 0.0
      %1684 = vmatprep.subr.mxu0 0.0
      %1685 = vmatpush1.msra.mxu0 0.0
      %1686 = vmatprep.subr.mxu0 0.0
      %1687 = vmatpush1.msra.mxu0 0.0
      %1688 = vmatprep.subr.mxu0 0.0
      %1689 = vmatpush1.msra.mxu0 0.0
      %1690 = vmatprep.subr.mxu0 0.0
      %1691 = vmatpush1.msra.mxu0 0.0
      %1692 = vmatprep.subr.mxu0 0.0
      %1693 = vmatpush1.msra.mxu0 0.0
      %1694 = vmatprep.subr.mxu0 0.0
      %1695 = vmatpush1.msra.mxu0 0.0
      %1696 = vmatprep.subr.mxu0 0.0
      %1697 = vmatpush1.msra.mxu0 0.0
      %1698 = vmatprep.subr.mxu0 0.0
      %1699 = vmatpush1.msra.mxu0 0.0
      %1700 = vmatprep.subr.mxu0 0.0
      %1701 = vmatpush1.msra.mxu0 0.0
      %1702 = vmatprep.subr.mxu0 0.0
      %1703 = vmatpush1.msra.mxu0 0.0
      %1704 = vmatprep.subr.mxu0 0.0
      %1705 = vmatpush1.msra.mxu0 0.0
      %1706 = vmatprep.mubr.f32.mxu0 0.0
      %1707 = vmatmul.mubr.f32.gmra.mrb[0].mxu0 %v1634
      %v1708 = vpop.f32.mrb[0].mxu0
      %v1709 = vadd.f32 0.0, %v1708
      %v1710 = vpop.f32.mrb[0].mxu0
      %1711 = vmatprep.mubr.f32.mxu0 0.0
      %1712 = vmatmul.mubr.f32.gmra.mrb[0].mxu0 %v1637
      %v1713 = vpop.f32.mrb[0].mxu0
      %v1714 = vadd.f32 0.0, %v1713
      %v1715 = vpop.f32.mrb[0].mxu0
      %1716 = vmatprep.mubr.f32.mxu0 0.0
      %1717 = vmatmul.mubr.f32.gmra.mrb[0].mxu0 %v1640
      %v1718 = vpop.f32.mrb[0].mxu0
      %v1719 = vadd.f32 0.0, %v1718
      %v1720 = vpop.f32.mrb[0].mxu0
      %1721 = vdwg.mxu0
      %v1722 = vadd.f32 %v441, %v1709
      %v1723 = vadd.f32 %v442, %v1714
      %v1724 = vadd.f32 %v443, %v1719
      %v1725 = vld [vmem:[%s6] sm:$0x1]
      %v1727 = vlaneseq
      %v1728 = vshrl.u32 %v1727, 7
      %v1729 = vsub.s32 0, %v1728
      %v1730 = vrot.slane %v1725, %v1729
      %v1732 = vadd.f32 %v1722, %v1730
      %v1733 = vadd.f32 %v1723, %v1730
      %v1734 = vadd.f32 %v1724, %v1730
      %v1735 = vld [vmem:[%s7] sm:$0x1]
      %v1736 = vld [vmem:[%s8] sm:$0x1]
      %v1737 = vsel %vm446, %v1732, 0.0
      %1738 = vadd.xlane.f32.xlu0 %v1737
      %v1739 = vpop.xlane.xlu0 %1738
      %v1740 = vsel %vm446, %v1733, 0.0
      %1741 = vadd.xlane.f32.xlu0 %v1740
      %v1742 = vpop.xlane.xlu0 %1741
      %v1743 = vsel %vm453, %v1734, 0.0
      %1744 = vadd.xlane.f32.xlu0 %v1743
      %v1745 = vpop.xlane.xlu0 %1744
      %v1746 = vmul.f32 %v1739, %v457
      %v1747 = vmul.f32 %v1742, %v457
      %v1748 = vmul.f32 %v1745, %v457
      %v1749 = vsub.f32 %v1732, %v1746
      %v1750 = vsub.f32 %v1733, %v1747
      %v1751 = vsub.f32 %v1734, %v1748
      %v1752 = vmul.f32 %v1749, %v1749
      %v1753 = vmul.f32 %v1750, %v1750
      %v1754 = vmul.f32 %v1751, %v1751
      %v1755 = vsel %vm446, %v1752, 0.0
      %1756 = vadd.xlane.f32.xlu0 %v1755
      %v1757 = vpop.xlane.xlu0 %1756
      %v1758 = vsel %vm446, %v1753, 0.0
      %1759 = vadd.xlane.f32.xlu0 %v1758
      %v1760 = vpop.xlane.xlu0 %1759
      %v1761 = vsel %vm453, %v1754, 0.0
      %1762 = vadd.xlane.f32.xlu0 %v1761
      %v1763 = vpop.xlane.xlu0 %1762
      %v1764 = vmul.f32 %v1757, %v457
      %v1765 = vmul.f32 %v1760, %v457
      %v1766 = vmul.f32 %v1763, %v457
      %v1767 = vadd.f32 %v1764, 1e-05
      %v1768 = vadd.f32 %v1765, 1e-05
      %v1769 = vadd.f32 %v1766, 1e-05
      %v1770 = vrsqrt.pop %v1767
      %v1771 = vrsqrt.pop %v1768
      %v1772 = vrsqrt.pop %v1769
      %v1773 = vmul.f32 %v1749, %v1770
      %v1774 = vmul.f32 %v1750, %v1771
      %v1775 = vmul.f32 %v1751, %v1772
      %v1777 = vlaneseq
      %v1778 = vshrl.u32 %v1777, 7
      %v1779 = vsub.s32 0, %v1778
      %v1780 = vrot.slane %v1735, %v1779
      %v1782 = vmul.f32 %v1773, %v1780
      %v1783 = vmul.f32 %v1774, %v1780
      %v1784 = vmul.f32 %v1775, %v1780
      %v1786 = vlaneseq
      %v1787 = vshrl.u32 %v1786, 7
      %v1788 = vsub.s32 0, %v1787
      %v1789 = vrot.slane %v1736, %v1788
      %v1791 = vadd.f32 %v1782, %v1789
      %v1792 = vadd.f32 %v1783, %v1789
      %v1793 = vadd.f32 %v1784, %v1789
      %v1794 = vld [vmem:[%s9] sm:$0xff]
      %v1795 = vld [vmem:[%s9 + $0x8] sm:$0xff]
      %v1796 = vld [vmem:[%s9 + $0x10] sm:$0xff]
      %v1797 = vld [vmem:[%s9 + $0x18] sm:$0xff]
      %v1798 = vld [vmem:[%s9 + $0x20] sm:$0xff]
      %v1799 = vld [vmem:[%s9 + $0x28] sm:$0xff]
      %v1800 = vld [vmem:[%s9 + $0x30] sm:$0xff]
      %v1801 = vld [vmem:[%s9 + $0x38] sm:$0xff]
      %v1802 = vld [vmem:[%s10] sm:$0x1]
      %v1804 = vlaneseq
      %v1805 = vshrl.u32 %v1804, 7
      %v1806 = vsub.s32 0, %v1805
      %v1807 = vrot.slane %v1802, %v1806
      %v1810 = vsel %vm446, %v1791, 0
      %v1813 = vsel %vm446, %v1792, 0
      %v1816 = vsel %vm446, %v1793, 0
      %1818 = vmatprep.subr.mxu0 0.0
      %1819 = vmatpush1.msra.mxu0 %v1794
      %1820 = vmatprep.subr.mxu0 0.0
      %1821 = vmatpush1.msra.mxu0 %v1795
      %1822 = vmatprep.subr.mxu0 0.0
      %1823 = vmatpush1.msra.mxu0 %v1796
      %1824 = vmatprep.subr.mxu0 0.0
      %1825 = vmatpush1.msra.mxu0 %v1797
      %1826 = vmatprep.subr.mxu0 0.0
      %1827 = vmatpush1.msra.mxu0 %v1798
      %1828 = vmatprep.subr.mxu0 0.0
      %1829 = vmatpush1.msra.mxu0 %v1799
      %1830 = vmatprep.subr.mxu0 0.0
      %1831 = vmatpush1.msra.mxu0 %v1800
      %1832 = vmatprep.subr.mxu0 0.0
      %1833 = vmatpush1.msra.mxu0 %v1801
      %1834 = vmatprep.subr.mxu0 0.0
      %1835 = vmatpush1.msra.mxu0 0.0
      %1836 = vmatprep.subr.mxu0 0.0
      %1837 = vmatpush1.msra.mxu0 0.0
      %1838 = vmatprep.subr.mxu0 0.0
      %1839 = vmatpush1.msra.mxu0 0.0
      %1840 = vmatprep.subr.mxu0 0.0
      %1841 = vmatpush1.msra.mxu0 0.0
      %1842 = vmatprep.subr.mxu0 0.0
      %1843 = vmatpush1.msra.mxu0 0.0
      %1844 = vmatprep.subr.mxu0 0.0
      %1845 = vmatpush1.msra.mxu0 0.0
      %1846 = vmatprep.subr.mxu0 0.0
      %1847 = vmatpush1.msra.mxu0 0.0
      %1848 = vmatprep.subr.mxu0 0.0
      %1849 = vmatpush1.msra.mxu0 0.0
      %1850 = vmatprep.subr.mxu0 0.0
      %1851 = vmatpush1.msra.mxu0 0.0
      %1852 = vmatprep.subr.mxu0 0.0
      %1853 = vmatpush1.msra.mxu0 0.0
      %1854 = vmatprep.subr.mxu0 0.0
      %1855 = vmatpush1.msra.mxu0 0.0
      %1856 = vmatprep.subr.mxu0 0.0
      %1857 = vmatpush1.msra.mxu0 0.0
      %1858 = vmatprep.subr.mxu0 0.0
      %1859 = vmatpush1.msra.mxu0 0.0
      %1860 = vmatprep.subr.mxu0 0.0
      %1861 = vmatpush1.msra.mxu0 0.0
      %1862 = vmatprep.subr.mxu0 0.0
      %1863 = vmatpush1.msra.mxu0 0.0
      %1864 = vmatprep.subr.mxu0 0.0
      %1865 = vmatpush1.msra.mxu0 0.0
      %1866 = vmatprep.subr.mxu0 0.0
      %1867 = vmatpush1.msra.mxu0 0.0
      %1868 = vmatprep.subr.mxu0 0.0
      %1869 = vmatpush1.msra.mxu0 0.0
      %1870 = vmatprep.subr.mxu0 0.0
      %1871 = vmatpush1.msra.mxu0 0.0
      %1872 = vmatprep.subr.mxu0 0.0
      %1873 = vmatpush1.msra.mxu0 0.0
      %1874 = vmatprep.subr.mxu0 0.0
      %1875 = vmatpush1.msra.mxu0 0.0
      %1876 = vmatprep.subr.mxu0 0.0
      %1877 = vmatpush1.msra.mxu0 0.0
      %1878 = vmatprep.subr.mxu0 0.0
      %1879 = vmatpush1.msra.mxu0 0.0
      %1880 = vmatprep.subr.mxu0 0.0
      %1881 = vmatpush1.msra.mxu0 0.0
      %1882 = vmatprep.mubr.f32.mxu0 0.0
      %1883 = vmatmul.mubr.f32.gmra.mrb[0].mxu0 %v1810
      %v1884 = vpop.f32.mrb[0].mxu0
      %v1885 = vadd.f32 %v1807, %v1884
      %v1886 = vpop.f32.mrb[0].mxu0
      %1887 = vmatprep.mubr.f32.mxu0 0.0
      %1888 = vmatmul.mubr.f32.gmra.mrb[0].mxu0 %v1813
      %v1889 = vpop.f32.mrb[0].mxu0
      %v1890 = vadd.f32 %v1807, %v1889
      %v1891 = vpop.f32.mrb[0].mxu0
      %1892 = vmatprep.mubr.f32.mxu0 0.0
      %1893 = vmatmul.mubr.f32.gmra.mrb[0].mxu0 %v1816
      %v1894 = vpop.f32.mrb[0].mxu0
      %v1895 = vadd.f32 %v1807, %v1894
      %v1896 = vpop.f32.mrb[0].mxu0
      %1897 = vdwg.mxu0
      %v1898 = vmul.f32 %v1885, %v1885
      %v1899 = vmul.f32 %v1890, %v1890
      %v1900 = vmul.f32 %v1895, %v1895
      %v1901 = vmul.f32 %v1885, %v1898
      %v1902 = vmul.f32 %v1890, %v1899
      %v1903 = vmul.f32 %v1895, %v1900
      %v1904 = vmul.f32 %v1901, 0.044715
      %v1905 = vmul.f32 %v1902, 0.044715
      %v1906 = vmul.f32 %v1903, 0.044715
      %v1907 = vadd.f32 %v1885, %v1904
      %v1908 = vadd.f32 %v1890, %v1905
      %v1909 = vadd.f32 %v1895, %v1906
      %v1910 = vmul.f32 %v1907, 0.7978846
      %v1911 = vmul.f32 %v1908, 0.7978846
      %v1912 = vmul.f32 %v1909, 0.7978846
      %v1913 = vtanh.pop %v1910
      %v1914 = vtanh.pop %v1911
      %v1915 = vtanh.pop %v1912
      %v1916 = vadd.f32 %v1913, 1.0
      %v1917 = vadd.f32 %v1914, 1.0
      %v1918 = vadd.f32 %v1915, 1.0
      %v1919 = vmul.f32 %v1916, 0.5
      %v1920 = vmul.f32 %v1917, 0.5
      %v1921 = vmul.f32 %v1918, 0.5
      %v1922 = vmul.f32 %v1885, %v1919
      %v1923 = vmul.f32 %v1890, %v1920
      %v1924 = vmul.f32 %v1895, %v1921
      %v1925 = vld [vmem:[%s11] sm:$0xff]
      %v1926 = vld [vmem:[%s11 + $0x8] sm:$0xff]
      %v1927 = vld [vmem:[%s11 + $0x10] sm:$0xff]
      %v1928 = vld [vmem:[%s11 + $0x18] sm:$0xff]
      %v1929 = vld [vmem:[%s11 + $0x20] sm:$0xff]
      %v1930 = vld [vmem:[%s11 + $0x28] sm:$0xff]
      %v1931 = vld [vmem:[%s11 + $0x30] sm:$0xff]
      %v1932 = vld [vmem:[%s11 + $0x38] sm:$0xff]
      %v1933 = vld [vmem:[%s11 + $0x40] sm:$0xff]
      %v1934 = vld [vmem:[%s11 + $0x48] sm:$0xff]
      %v1935 = vld [vmem:[%s11 + $0x50] sm:$0xff]
      %v1936 = vld [vmem:[%s11 + $0x58] sm:$0xff]
      %v1937 = vld [vmem:[%s11 + $0x60] sm:$0xff]
      %v1938 = vld [vmem:[%s11 + $0x68] sm:$0xff]
      %v1939 = vld [vmem:[%s11 + $0x70] sm:$0xff]
      %v1940 = vld [vmem:[%s11 + $0x78] sm:$0xff]
      %1941 = vmatprep.subr.mxu0 0.0
      %1942 = vmatpush1.msra.mxu0 %v1925
      %1943 = vmatprep.subr.mxu0 0.0
      %1944 = vmatpush1.msra.mxu0 %v1926
      %1945 = vmatprep.subr.mxu0 0.0
      %1946 = vmatpush1.msra.mxu0 %v1927
      %1947 = vmatprep.subr.mxu0 0.0
      %1948 = vmatpush1.msra.mxu0 %v1928
      %1949 = vmatprep.subr.mxu0 0.0
      %1950 = vmatpush1.msra.mxu0 %v1929
      %1951 = vmatprep.subr.mxu0 0.0
      %1952 = vmatpush1.msra.mxu0 %v1930
      %1953 = vmatprep.subr.mxu0 0.0
      %1954 = vmatpush1.msra.mxu0 %v1931
      %1955 = vmatprep.subr.mxu0 0.0
      %1956 = vmatpush1.msra.mxu0 %v1932
      %1957 = vmatprep.subr.mxu0 0.0
      %1958 = vmatpush1.msra.mxu0 %v1933
      %1959 = vmatprep.subr.mxu0 0.0
      %1960 = vmatpush1.msra.mxu0 %v1934
      %1961 = vmatprep.subr.mxu0 0.0
      %1962 = vmatpush1.msra.mxu0 %v1935
      %1963 = vmatprep.subr.mxu0 0.0
      %1964 = vmatpush1.msra.mxu0 %v1936
      %1965 = vmatprep.subr.mxu0 0.0
      %1966 = vmatpush1.msra.mxu0 %v1937
      %1967 = vmatprep.subr.mxu0 0.0
      %1968 = vmatpush1.msra.mxu0 %v1938
      %1969 = vmatprep.subr.mxu0 0.0
      %1970 = vmatpush1.msra.mxu0 %v1939
      %1971 = vmatprep.subr.mxu0 0.0
      %1972 = vmatpush1.msra.mxu0 %v1940
      %1973 = vmatprep.subr.mxu0 0.0
      %1974 = vmatpush1.msra.mxu0 0.0
      %1975 = vmatprep.subr.mxu0 0.0
      %1976 = vmatpush1.msra.mxu0 0.0
      %1977 = vmatprep.subr.mxu0 0.0
      %1978 = vmatpush1.msra.mxu0 0.0
      %1979 = vmatprep.subr.mxu0 0.0
      %1980 = vmatpush1.msra.mxu0 0.0
      %1981 = vmatprep.subr.mxu0 0.0
      %1982 = vmatpush1.msra.mxu0 0.0
      %1983 = vmatprep.subr.mxu0 0.0
      %1984 = vmatpush1.msra.mxu0 0.0
      %1985 = vmatprep.subr.mxu0 0.0
      %1986 = vmatpush1.msra.mxu0 0.0
      %1987 = vmatprep.subr.mxu0 0.0
      %1988 = vmatpush1.msra.mxu0 0.0
      %1989 = vmatprep.subr.mxu0 0.0
      %1990 = vmatpush1.msra.mxu0 0.0
      %1991 = vmatprep.subr.mxu0 0.0
      %1992 = vmatpush1.msra.mxu0 0.0
      %1993 = vmatprep.subr.mxu0 0.0
      %1994 = vmatpush1.msra.mxu0 0.0
      %1995 = vmatprep.subr.mxu0 0.0
      %1996 = vmatpush1.msra.mxu0 0.0
      %1997 = vmatprep.subr.mxu0 0.0
      %1998 = vmatpush1.msra.mxu0 0.0
      %1999 = vmatprep.subr.mxu0 0.0
      %2000 = vmatpush1.msra.mxu0 0.0
      %2001 = vmatprep.subr.mxu0 0.0
      %2002 = vmatpush1.msra.mxu0 0.0
      %2003 = vmatprep.subr.mxu0 0.0
      %2004 = vmatpush1.msra.mxu0 0.0
      %2005 = vmatprep.mubr.f32.mxu0 0.0
      %2006 = vmatmul.mubr.f32.gmra.mrb[0].mxu0 %v1922
      %v2007 = vpop.f32.mrb[0].mxu0
      %v2008 = vadd.f32 0.0, %v2007
      %v2009 = vpop.f32.mrb[0].mxu0
      %2010 = vmatprep.mubr.f32.mxu0 0.0
      %2011 = vmatmul.mubr.f32.gmra.mrb[0].mxu0 %v1923
      %v2012 = vpop.f32.mrb[0].mxu0
      %v2013 = vadd.f32 0.0, %v2012
      %v2014 = vpop.f32.mrb[0].mxu0
      %2015 = vmatprep.mubr.f32.mxu0 0.0
      %2016 = vmatmul.mubr.f32.gmra.mrb[0].mxu0 %v1924
      %v2017 = vpop.f32.mrb[0].mxu0
      %v2018 = vadd.f32 0.0, %v2017
      %v2019 = vpop.f32.mrb[0].mxu0
      %2020 = vdwg.mxu0
      %v2021 = vadd.f32 %v1732, %v2008
      %v2022 = vadd.f32 %v1733, %v2013
      %v2023 = vadd.f32 %v1734, %v2018
      %v2024 = vld [vmem:[%s12] sm:$0x1]
      %v2026 = vlaneseq
      %v2027 = vshrl.u32 %v2026, 7
      %v2028 = vsub.s32 0, %v2027
      %v2029 = vrot.slane %v2024, %v2028
      %v2031 = vadd.f32 %v2021, %v2029
      %v2032 = vadd.f32 %v2022, %v2029
      %v2033 = vadd.f32 %v2023, %v2029
      %2034 = vst.msk [vmem:[%s440] sm:$0xff] %vm446, %v2031
      %2035 = vst.msk [vmem:[%s440 + $0x8] sm:$0xff] %vm446, %v2032
      %2036 = vst.msk [vmem:[%s440 + $0x10] sm:$0xf] %vm453, %v2033
      %p2037 = scmp.lt.s32.totalorder %s24, 1
      %s2038 = scalar_select %p2037, %s24, 1
      %s2039 = smul.addr %s2038, 3
      %s2040 = smul.addr %s2039, 8
      %s2041 = scalar_lea.vmem %s13, %s2040
      // Predicated region
      $region73: #{tr_glove_forward.3} parent=71 // pred_check
        %p2042 = pneg %p320
      $region74: #{tr_glove_forward.3} parent=71 // pred_check_branch
        %2044 = sbr.rel (%p2042) target = $region76
      $region75: #{tr_glove_forward.3} parent=71 // pred_region
        _
      $region76: #{tr_glove_forward.3} parent=71 // pred_fallthru
        _
    $region72: #{tr_glove_forward.3} parent=5 // pred_fallthru
      _
    %p2045 = scmp.le.s32.totalorder 2, %s19
    // Predicated region
    $region77: #{tr_glove_forward.3} parent=5 // pred_check
      %p2046 = pneg %p2045
    $region78: #{tr_glove_forward.3} parent=5 // pred_check_branch
      %2048 = sbr.rel (%p2046) target = $region80
    $region79: #{tr_glove_forward.3} parent=5 // pred_region
      %s2049 = ssub.s32 %s19, 2
      // Predicated region
      $region81: #{tr_glove_forward.3} parent=79 // pred_check
        %p2050 = pneg %p326
      $region82: #{tr_glove_forward.3} parent=79 // pred_check_branch
        %2052 = sbr.rel (%p2050) target = $region84
      $region83: #{tr_glove_forward.3} parent=79 // pred_region
        %p2053 = scmp.lt.s32.totalorder %s25, 1
        %s2054 = scalar_select %p2053, %s25, 1
        %s2055 = smul.addr %s2054, 3
        %s2056 = smul.addr %s2055, 8
        %s2057 = scalar_lea.vmem %s13, %s2056
      $region84: #{tr_glove_forward.3} parent=79 // pred_fallthru
        _
    $region80: #{tr_glove_forward.3} parent=5 // pred_fallthru
      _
  $region6: #{tr_glove_forward.3} parent=0 // loop_footer
    %s23 = sadd.s32 1, %s19
  $region7: #{tr_glove_forward.3} parent=0 // loop_footer_branch
    %18 = sbr.rel target = $region3
  $region8: #{tr_glove_forward.3} parent=0 // loop_exit
    _

</llo_original>
